<compile_context>
chip_gen: v7x
topology: tpu7x:2x2x1
jax: 0.10.0
libtpu: 0.0.40
codegen_flags: <defaults>
</compile_context>

<pallas_src>
import numpy as np
import jax
import jax.numpy as jnp
from jax.experimental import pallas as pl
from jax.experimental.pallas import tpu as pltpu

NUM_LANDMARKS = 17
NUM_AUS = 17
OUT_PAD = 128          # lane-dense padded output width (>= NUM_AUS)


# ----------------------------------------------------------------------------
# Pallas kernel: forward pass for one tile of BT samples.
# ----------------------------------------------------------------------------
def fe_cnn_kernel(x_ref,                                  # (BT, 34)   f32
                  w1_ref, b1_ref,                         # (34, 512)  bf16, (1, 512)  f32
                  w2_ref, b2_ref,                         # (256, 512) bf16, (1, 512)  f32
                  w3_ref, b3_ref,                         # (256, 512) bf16, (1, 512)  f32
                  wf1_ref, bf1_ref,                       # (256, 256) bf16, (1, 256)  f32
                  wf2_ref, bf2_ref,                       # (256, 128) bf16, (1, 128)  f32
                  wf3_ref, bf3_ref,                       # (128, 128) f32,  (1, 128)  f32
                  out_ref):                               # (BT, 128)  f32

    def dense_bf16(h, w_ref, b_ref):
        # bf16 x bf16 -> f32 accumulation on the MXU; bias add stays f32.
        return (jnp.dot(h.astype(jnp.bfloat16), w_ref[...],
                        preferred_element_type=jnp.float32) + b_ref[...])

    def conv_relu_pool(h, w_ref, b_ref):
        # One banded matmul per conv layer; output columns are ordered
        # [even positions | odd positions], so MaxPool1d(2) is a single max
        # of the two contiguous lane halves (the odd tail of L=17 was never
        # emitted, matching PyTorch's floor-division pooling).
        y = jnp.maximum(dense_bf16(h, w_ref, b_ref), 0.0)  # (BT, 2*half) f32
        half = y.shape[1] // 2
        return jnp.maximum(y[:, :half], y[:, half:])       # (BT, half)   f32

    h = x_ref[...]                                         # (BT, 34)
    h = conv_relu_pool(h, w1_ref, b1_ref)                  # (BT, 256)  L=8,  C=32
    h = conv_relu_pool(h, w2_ref, b2_ref)                  # (BT, 256)  L=4,  C=64
    h = conv_relu_pool(h, w3_ref, b3_ref)                  # (BT, 256)  L=2,  C=128
    h = jnp.maximum(dense_bf16(h, wf1_ref, bf1_ref), 0.0)  # (BT, 256)
    h = jnp.maximum(dense_bf16(h, wf2_ref, bf2_ref), 0.0)  # (BT, 128)

    # fc3 + sigmoid kept fully in f32; reciprocal goes to the EUP slot.
    z = (jnp.dot(h, wf3_ref[...], preferred_element_type=jnp.float32)
         + bf3_ref[...])                                   # (BT, 128)
    out_ref[...] = pl.reciprocal(1.0 + jnp.exp(-z), approx=True)


# ----------------------------------------------------------------------------
# Wrapper glue: torch-layout params -> banded / re-laid-out dense weights.
# ----------------------------------------------------------------------------
def _round_up(n, m):
    return ((n + m - 1) // m) * m


def _pooled_out_positions(l_in):
    # Conv output positions kept by MaxPool1d(2) (odd tail dropped), ordered
    # [evens | odds] so pooling becomes max(first_half, second_half).
    n = 2 * (l_in // 2)
    return list(range(0, n, 2)) + list(range(1, n, 2))


def _conv_as_banded_dense(w_torch, b_torch, l_in):
    """torch Conv1d(k=3, stride=1, pad=1) -> dense (l_in*Cin, n_kept*Cout)."""
    w = np.asarray(w_torch, np.float32)                   # (Cout, Cin, 3)
    b = np.asarray(b_torch, np.float32)
    cout, cin, _ = w.shape
    pos = _pooled_out_positions(l_in)
    W = np.zeros((l_in * cin, len(pos) * cout), np.float32)
    for oi, lo in enumerate(pos):
        for k in range(3):
            li = lo + k - 1                               # padding = 1
            if 0 <= li < l_in:
                W[li * cin:(li + 1) * cin,
                  oi * cout:(oi + 1) * cout] = w[:, :, k].T
    bvec = np.tile(b, len(pos))[None, :]
    return jnp.asarray(W, jnp.bfloat16), jnp.asarray(bvec, jnp.float32)


def _prepare_weights(p):
    w1, b1 = _conv_as_banded_dense(p["conv1_w"], p["conv1_b"], NUM_LANDMARKS)      # (34, 512)
    w2, b2 = _conv_as_banded_dense(p["conv2_w"], p["conv2_b"], NUM_LANDMARKS // 2) # (256, 512)
    w3, b3 = _conv_as_banded_dense(p["conv3_w"], p["conv3_b"], NUM_LANDMARKS // 4) # (256, 512)

    l3 = NUM_LANDMARKS // 8                               # 2
    # torch flatten is channel-major (flat = c*l3 + l); kernel layout is l*128 + c.
    wf1 = jnp.asarray(
        np.asarray(p["fc1_w"], np.float32).reshape(256, 128, l3)
        .transpose(2, 1, 0).reshape(128 * l3, 256), jnp.bfloat16)
    bf1 = jnp.asarray(np.asarray(p["fc1_b"], np.float32)[None, :])
    wf2 = jnp.asarray(np.asarray(p["fc2_w"], np.float32).T, jnp.bfloat16)   # (256, 128)
    bf2 = jnp.asarray(np.asarray(p["fc2_b"], np.float32)[None, :])
    # fc3 padded to a lane-dense 128-wide output slab (cols >= NUM_AUS discarded).
    # Kept f32 so the final layer + sigmoid hold full precision.
    wf3 = np.zeros((128, OUT_PAD), np.float32)
    wf3[:, :NUM_AUS] = np.asarray(p["fc3_w"], np.float32).T
    bf3 = np.zeros((1, OUT_PAD), np.float32)
    bf3[0, :NUM_AUS] = np.asarray(p["fc3_b"], np.float32)
    return [w1, b1, w2, b2, w3, b3, wf1, bf1, wf2, bf2,
            jnp.asarray(wf3), jnp.asarray(bf3)]


def _choose_block_b(B, block_b):
    """Pick the batch tile: big enough to amortize per-step overhead, small
    enough that the grid has >= 4 steps (keeps both v7x TCs busy and lets the
    pipeline overlap DMA with compute) whenever the batch allows it."""
    bt = min(block_b, _round_up(max(B, 1), 8))
    while bt > 64 and pl.cdiv(B, bt) < 4:
        bt //= 2
    return _round_up(max(bt, 8), 8)


def facial_expression_cnn_forward(x, p, block_b=512):
    """x: (B, 17, 2) float32; p: dict of torch-layout params. Returns (B, 17)."""
    B = x.shape[0]
    assert x.shape[1:] == (NUM_LANDMARKS, 2)
    assert NUM_LANDMARKS // 8 == 2

    weights = _prepare_weights(p)

    BT = _choose_block_b(B, block_b)                      # samples per grid step
    Bp = _round_up(B, BT)
    x2d = x.reshape(B, NUM_LANDMARKS * 2).astype(jnp.float32)   # lane = l*2 + coord
    if Bp != B:
        x2d = jnp.pad(x2d, ((0, Bp - B), (0, 0)))

    flops = 2 * Bp * (34 * 512 + 2 * 256 * 512 + 256 * 256 + 256 * 128 + 128 * OUT_PAD)
    bytes_accessed = (4 * Bp * (34 + OUT_PAD)
                      + sum(int(np.prod(w.shape)) * w.dtype.itemsize for w in weights))

    out = pl.pallas_call(
        fe_cnn_kernel,
        out_shape=jax.ShapeDtypeStruct((Bp, OUT_PAD), jnp.float32),
        grid=(Bp // BT,),
        in_specs=[pl.BlockSpec((BT, NUM_LANDMARKS * 2), lambda i: (i, 0))]
                 + [pl.BlockSpec(w.shape, lambda i: (0, 0)) for w in weights],
        out_specs=pl.BlockSpec((BT, OUT_PAD), lambda i: (i, 0)),
        compiler_params=pltpu.CompilerParams(
            dimension_semantics=("parallel",),
            vmem_limit_bytes=32 * 1024 * 1024),
        cost_estimate=pl.CostEstimate(flops=flops,
                                      transcendentals=2 * Bp * OUT_PAD,
                                      bytes_accessed=bytes_accessed),
    )(x2d, *weights)
    return out[:B, :NUM_AUS]


# ----------------------------------------------------------------------------
# Deterministic parameter init (torch layouts) + pure-JAX reference
# ----------------------------------------------------------------------------
def make_params(key):
    ks = jax.random.split(key, 12)

    def u(k, shape, fan_in):
        bound = 1.0 / np.sqrt(fan_in)
        return jax.random.uniform(k, shape, jnp.float32, -bound, bound)

    return {
        "conv1_w": u(ks[0], (32, 2, 3), 2 * 3),    "conv1_b": u(ks[1], (32,), 2 * 3),
        "conv2_w": u(ks[2], (64, 32, 3), 32 * 3),  "conv2_b": u(ks[3], (64,), 32 * 3),
        "conv3_w": u(ks[4], (128, 64, 3), 64 * 3), "conv3_b": u(ks[5], (128,), 64 * 3),
        "fc1_w":   u(ks[6], (256, 256), 256),      "fc1_b":   u(ks[7], (256,), 256),
        "fc2_w":   u(ks[8], (128, 256), 256),      "fc2_b":   u(ks[9], (128,), 256),
        "fc3_w":   u(ks[10], (NUM_AUS, 128), 128), "fc3_b":   u(ks[11], (NUM_AUS,), 128),
    }


def reference_forward(x, p):
    """Plain-JAX mirror of the PyTorch forward (NCW convs, channel-major flatten)."""
    xt = jnp.transpose(x, (0, 2, 1))                      # (B, 2, L)

    def conv1d(h, w, b):
        y = jax.lax.conv_general_dilated(
            h, w, window_strides=(1,), padding=((1, 1),),
            dimension_numbers=("NCH", "OIH", "NCH"), precision="highest")
        return y + b[None, :, None]

    def pool(h):
        B, C, L = h.shape
        return h[:, :, :2 * (L // 2)].reshape(B, C, L // 2, 2).max(axis=3)

    h = pool(jax.nn.relu(conv1d(xt, p["conv1_w"], p["conv1_b"])))
    h = pool(jax.nn.relu(conv1d(h,  p["conv2_w"], p["conv2_b"])))
    h = pool(jax.nn.relu(conv1d(h,  p["conv3_w"], p["conv3_b"])))
    flat = h.reshape(h.shape[0], -1)                      # channel-major like torch .view
    f1 = jax.nn.relu(jnp.dot(flat, p["fc1_w"].T, precision="highest") + p["fc1_b"])
    f2 = jax.nn.relu(jnp.dot(f1, p["fc2_w"].T, precision="highest") + p["fc2_b"])
    return jax.nn.sigmoid(jnp.dot(f2, p["fc3_w"].T, precision="highest") + p["fc3_b"])


if __name__ == "__main__":
    key = jax.random.PRNGKey(0)
    kp, kx = jax.random.split(key)
    params = make_params(kp)

    B = 100                                               # exercises padding + 2 grid steps
    x = jax.random.normal(kx, (B, NUM_LANDMARKS, 2), jnp.float32)

    out = facial_expression_cnn_forward(x, params)
    out = jax.block_until_ready(out)

    ref = reference_forward(x, params)
    # bf16 matmuls (f32 accumulation) upstream of an f32 fc3+sigmoid: loosened
    # tolerance vs. the all-f32 kernel.
    np.testing.assert_allclose(np.asarray(out), np.asarray(ref), rtol=2e-2, atol=2e-2)

    print("KERNEL_OK")
</pallas_src>

<mosaic_0001>
module attributes {stable_mosaic.version = 11 : i64} {
  func.func @fe_cnn_kernel(%arg0: i32, %arg1: memref<56x34xf32, #tpu.memory_space<vmem>>, %arg2: memref<34x512xbf16, #tpu.memory_space<vmem>>, %arg3: memref<1x512xf32, #tpu.memory_space<vmem>>, %arg4: memref<256x512xbf16, #tpu.memory_space<vmem>>, %arg5: memref<1x512xf32, #tpu.memory_space<vmem>>, %arg6: memref<256x512xbf16, #tpu.memory_space<vmem>>, %arg7: memref<1x512xf32, #tpu.memory_space<vmem>>, %arg8: memref<256x256xbf16, #tpu.memory_space<vmem>>, %arg9: memref<1x256xf32, #tpu.memory_space<vmem>>, %arg10: memref<256x128xbf16, #tpu.memory_space<vmem>>, %arg11: memref<1x128xf32, #tpu.memory_space<vmem>>, %arg12: memref<128x128xf32, #tpu.memory_space<vmem>>, %arg13: memref<1x128xf32, #tpu.memory_space<vmem>>, %arg14: memref<56x128xf32, #tpu.memory_space<vmem>>) attributes {dimension_semantics = [#tpu.dimension_semantics<parallel>], iteration_bounds = array<i64: 2>, scalar_prefetch = 0 : i64, scratch_operands = 0 : i64, tpu.core_type = #tpu.core_type<tc>, window_params = [{transform_indices = @transform_0, window_bounds = array<i64: 56, 34>}, {pipeline_mode = #tpu.pipeline_mode<synchronous>, transform_indices = @transform_1, window_bounds = array<i64: 34, 512>}, {pipeline_mode = #tpu.pipeline_mode<synchronous>, transform_indices = @transform_2, window_bounds = array<i64: 1, 512>}, {pipeline_mode = #tpu.pipeline_mode<synchronous>, transform_indices = @transform_3, window_bounds = array<i64: 256, 512>}, {pipeline_mode = #tpu.pipeline_mode<synchronous>, transform_indices = @transform_4, window_bounds = array<i64: 1, 512>}, {pipeline_mode = #tpu.pipeline_mode<synchronous>, transform_indices = @transform_5, window_bounds = array<i64: 256, 512>}, {pipeline_mode = #tpu.pipeline_mode<synchronous>, transform_indices = @transform_6, window_bounds = array<i64: 1, 512>}, {pipeline_mode = #tpu.pipeline_mode<synchronous>, transform_indices = @transform_7, window_bounds = array<i64: 256, 256>}, {pipeline_mode = #tpu.pipeline_mode<synchronous>, transform_indices = @transform_8, window_bounds = array<i64: 1, 256>}, {pipeline_mode = #tpu.pipeline_mode<synchronous>, transform_indices = @transform_9, window_bounds = array<i64: 256, 128>}, {pipeline_mode = #tpu.pipeline_mode<synchronous>, transform_indices = @transform_10, window_bounds = array<i64: 1, 128>}, {pipeline_mode = #tpu.pipeline_mode<synchronous>, transform_indices = @transform_11, window_bounds = array<i64: 128, 128>}, {pipeline_mode = #tpu.pipeline_mode<synchronous>, transform_indices = @transform_12, window_bounds = array<i64: 1, 128>}, {transform_indices = @transform_13, window_bounds = array<i64: 56, 128>}]} {
    %c0 = arith.constant 0 : index
    %c0_0 = arith.constant 0 : index
    %0 = vector.load %arg1[%c0, %c0_0] : memref<56x34xf32, #tpu.memory_space<vmem>>, vector<56x34xf32>
    %1 = arith.truncf %0 : vector<56x34xf32> to vector<56x34xbf16>
    %c0_1 = arith.constant 0 : index
    %c0_2 = arith.constant 0 : index
    %2 = vector.load %arg2[%c0_1, %c0_2] : memref<34x512xbf16, #tpu.memory_space<vmem>>, vector<34x512xbf16>
    %cst = arith.constant dense<0.000000e+00> : vector<56x512xf32>
    %3 = tpu.matmul %1, %2, %cst {dimension_numbers = #tpu.dot_dimension_numbers<[1], [0], [0], [1], [0, 0, 1, 1], [], []>} : vector<56x34xbf16>, vector<34x512xbf16>, vector<56x512xf32> -> vector<56x512xf32>
    %c0_3 = arith.constant 0 : index
    %c0_4 = arith.constant 0 : index
    %4 = vector.load %arg3[%c0_3, %c0_4] : memref<1x512xf32, #tpu.memory_space<vmem>>, vector<1x512xf32>
    %5 = vector.broadcast %4 : vector<1x512xf32> to vector<56x512xf32>
    %6 = arith.addf %3, %5 : vector<56x512xf32>
    %cst_5 = arith.constant 0.000000e+00 : f32
    %7 = vector.broadcast %cst_5 : f32 to vector<56x512xf32>
    %8 = arith.maximumf %6, %7 : vector<56x512xf32>
    %9 = vector.extract_strided_slice %8 {offsets = [0, 0], sizes = [56, 256], strides = [1, 1]} : vector<56x512xf32> to vector<56x256xf32>
    %10 = vector.extract_strided_slice %8 {offsets = [0, 256], sizes = [56, 256], strides = [1, 1]} : vector<56x512xf32> to vector<56x256xf32>
    %11 = arith.maximumf %9, %10 : vector<56x256xf32>
    %12 = arith.truncf %11 : vector<56x256xf32> to vector<56x256xbf16>
    %c0_6 = arith.constant 0 : index
    %c0_7 = arith.constant 0 : index
    %13 = vector.load %arg4[%c0_6, %c0_7] : memref<256x512xbf16, #tpu.memory_space<vmem>>, vector<256x512xbf16>
    %cst_8 = arith.constant dense<0.000000e+00> : vector<56x512xf32>
    %14 = tpu.matmul %12, %13, %cst_8 {dimension_numbers = #tpu.dot_dimension_numbers<[1], [0], [0], [1], [0, 0, 1, 1], [], []>} : vector<56x256xbf16>, vector<256x512xbf16>, vector<56x512xf32> -> vector<56x512xf32>
    %c0_9 = arith.constant 0 : index
    %c0_10 = arith.constant 0 : index
    %15 = vector.load %arg5[%c0_9, %c0_10] : memref<1x512xf32, #tpu.memory_space<vmem>>, vector<1x512xf32>
    %16 = vector.broadcast %15 : vector<1x512xf32> to vector<56x512xf32>
    %17 = arith.addf %14, %16 : vector<56x512xf32>
    %cst_11 = arith.constant 0.000000e+00 : f32
    %18 = vector.broadcast %cst_11 : f32 to vector<56x512xf32>
    %19 = arith.maximumf %17, %18 : vector<56x512xf32>
    %20 = vector.extract_strided_slice %19 {offsets = [0, 0], sizes = [56, 256], strides = [1, 1]} : vector<56x512xf32> to vector<56x256xf32>
    %21 = vector.extract_strided_slice %19 {offsets = [0, 256], sizes = [56, 256], strides = [1, 1]} : vector<56x512xf32> to vector<56x256xf32>
    %22 = arith.maximumf %20, %21 : vector<56x256xf32>
    %23 = arith.truncf %22 : vector<56x256xf32> to vector<56x256xbf16>
    %c0_12 = arith.constant 0 : index
    %c0_13 = arith.constant 0 : index
    %24 = vector.load %arg6[%c0_12, %c0_13] : memref<256x512xbf16, #tpu.memory_space<vmem>>, vector<256x512xbf16>
    %cst_14 = arith.constant dense<0.000000e+00> : vector<56x512xf32>
    %25 = tpu.matmul %23, %24, %cst_14 {dimension_numbers = #tpu.dot_dimension_numbers<[1], [0], [0], [1], [0, 0, 1, 1], [], []>} : vector<56x256xbf16>, vector<256x512xbf16>, vector<56x512xf32> -> vector<56x512xf32>
    %c0_15 = arith.constant 0 : index
    %c0_16 = arith.constant 0 : index
    %26 = vector.load %arg7[%c0_15, %c0_16] : memref<1x512xf32, #tpu.memory_space<vmem>>, vector<1x512xf32>
    %27 = vector.broadcast %26 : vector<1x512xf32> to vector<56x512xf32>
    %28 = arith.addf %25, %27 : vector<56x512xf32>
    %cst_17 = arith.constant 0.000000e+00 : f32
    %29 = vector.broadcast %cst_17 : f32 to vector<56x512xf32>
    %30 = arith.maximumf %28, %29 : vector<56x512xf32>
    %31 = vector.extract_strided_slice %30 {offsets = [0, 0], sizes = [56, 256], strides = [1, 1]} : vector<56x512xf32> to vector<56x256xf32>
    %32 = vector.extract_strided_slice %30 {offsets = [0, 256], sizes = [56, 256], strides = [1, 1]} : vector<56x512xf32> to vector<56x256xf32>
    %33 = arith.maximumf %31, %32 : vector<56x256xf32>
    %34 = arith.truncf %33 : vector<56x256xf32> to vector<56x256xbf16>
    %c0_18 = arith.constant 0 : index
    %c0_19 = arith.constant 0 : index
    %35 = vector.load %arg8[%c0_18, %c0_19] : memref<256x256xbf16, #tpu.memory_space<vmem>>, vector<256x256xbf16>
    %cst_20 = arith.constant dense<0.000000e+00> : vector<56x256xf32>
    %36 = tpu.matmul %34, %35, %cst_20 {dimension_numbers = #tpu.dot_dimension_numbers<[1], [0], [0], [1], [0, 0, 1, 1], [], []>} : vector<56x256xbf16>, vector<256x256xbf16>, vector<56x256xf32> -> vector<56x256xf32>
    %c0_21 = arith.constant 0 : index
    %c0_22 = arith.constant 0 : index
    %37 = vector.load %arg9[%c0_21, %c0_22] : memref<1x256xf32, #tpu.memory_space<vmem>>, vector<1x256xf32>
    %38 = vector.broadcast %37 : vector<1x256xf32> to vector<56x256xf32>
    %39 = arith.addf %36, %38 : vector<56x256xf32>
    %cst_23 = arith.constant 0.000000e+00 : f32
    %40 = vector.broadcast %cst_23 : f32 to vector<56x256xf32>
    %41 = arith.maximumf %39, %40 : vector<56x256xf32>
    %42 = arith.truncf %41 : vector<56x256xf32> to vector<56x256xbf16>
    %c0_24 = arith.constant 0 : index
    %c0_25 = arith.constant 0 : index
    %43 = vector.load %arg10[%c0_24, %c0_25] : memref<256x128xbf16, #tpu.memory_space<vmem>>, vector<256x128xbf16>
    %cst_26 = arith.constant dense<0.000000e+00> : vector<56x128xf32>
    %44 = tpu.matmul %42, %43, %cst_26 {dimension_numbers = #tpu.dot_dimension_numbers<[1], [0], [0], [1], [0, 0, 1, 1], [], []>} : vector<56x256xbf16>, vector<256x128xbf16>, vector<56x128xf32> -> vector<56x128xf32>
    %c0_27 = arith.constant 0 : index
    %c0_28 = arith.constant 0 : index
    %45 = vector.load %arg11[%c0_27, %c0_28] : memref<1x128xf32, #tpu.memory_space<vmem>>, vector<1x128xf32>
    %46 = vector.broadcast %45 : vector<1x128xf32> to vector<56x128xf32>
    %47 = arith.addf %44, %46 : vector<56x128xf32>
    %cst_29 = arith.constant 0.000000e+00 : f32
    %48 = vector.broadcast %cst_29 : f32 to vector<56x128xf32>
    %49 = arith.maximumf %47, %48 : vector<56x128xf32>
    %c0_30 = arith.constant 0 : index
    %c0_31 = arith.constant 0 : index
    %50 = vector.load %arg12[%c0_30, %c0_31] : memref<128x128xf32, #tpu.memory_space<vmem>>, vector<128x128xf32>
    %cst_32 = arith.constant dense<0.000000e+00> : vector<56x128xf32>
    %51 = tpu.matmul %49, %50, %cst_32 {dimension_numbers = #tpu.dot_dimension_numbers<[1], [0], [0], [1], [0, 0, 1, 1], [], []>} : vector<56x128xf32>, vector<128x128xf32>, vector<56x128xf32> -> vector<56x128xf32>
    %c0_33 = arith.constant 0 : index
    %c0_34 = arith.constant 0 : index
    %52 = vector.load %arg13[%c0_33, %c0_34] : memref<1x128xf32, #tpu.memory_space<vmem>>, vector<1x128xf32>
    %53 = vector.broadcast %52 : vector<1x128xf32> to vector<56x128xf32>
    %54 = arith.addf %51, %53 : vector<56x128xf32>
    %cst_35 = arith.constant 0.000000e+00 : f32
    %55 = vector.broadcast %cst_35 : f32 to vector<56x128xf32>
    %56 = arith.subf %55, %54 : vector<56x128xf32>
    %57 = math.exp %56 : vector<56x128xf32>
    %cst_36 = arith.constant 1.000000e+00 : f32
    %58 = vector.broadcast %cst_36 : f32 to vector<56x128xf32>
    %59 = arith.addf %58, %57 : vector<56x128xf32>
    %60 = tpu.reciprocal %59 {approx = true} : vector<56x128xf32> -> vector<56x128xf32>
    %c0_37 = arith.constant 0 : index
    %c0_38 = arith.constant 0 : index
    %61 = vector.load %arg14[%c0_37, %c0_38] : memref<56x128xf32, #tpu.memory_space<vmem>>, vector<56x128xf32>
    tpu.vector_store %arg14[%c0_37, %c0_38], %60 {strides = array<i32>} : memref<56x128xf32, #tpu.memory_space<vmem>>, vector<56x128xf32>,
    return
  }
  func.func @transform_0(%arg0: i32) -> (i32, i32) {
    %c0_i32 = arith.constant 0 : i32
    %c0_i32_0 = arith.constant 0 : i32
    return %arg0, %c0_i32 : i32, i32
  }
  func.func @transform_1(%arg0: i32) -> (i32, i32) {
    %c0_i32 = arith.constant 0 : i32
    %c0_i32_0 = arith.constant 0 : i32
    %c0_i32_1 = arith.constant 0 : i32
    return %c0_i32, %c0_i32_0 : i32, i32
  }
  func.func @transform_2(%arg0: i32) -> (i32, i32) {
    %c0_i32 = arith.constant 0 : i32
    %c0_i32_0 = arith.constant 0 : i32
    %c0_i32_1 = arith.constant 0 : i32
    return %c0_i32, %c0_i32_0 : i32, i32
  }
  func.func @transform_3(%arg0: i32) -> (i32, i32) {
    %c0_i32 = arith.constant 0 : i32
    %c0_i32_0 = arith.constant 0 : i32
    %c0_i32_1 = arith.constant 0 : i32
    return %c0_i32, %c0_i32_0 : i32, i32
  }
  func.func @transform_4(%arg0: i32) -> (i32, i32) {
    %c0_i32 = arith.constant 0 : i32
    %c0_i32_0 = arith.constant 0 : i32
    %c0_i32_1 = arith.constant 0 : i32
    return %c0_i32, %c0_i32_0 : i32, i32
  }
  func.func @transform_5(%arg0: i32) -> (i32, i32) {
    %c0_i32 = arith.constant 0 : i32
    %c0_i32_0 = arith.constant 0 : i32
    %c0_i32_1 = arith.constant 0 : i32
    return %c0_i32, %c0_i32_0 : i32, i32
  }
  func.func @transform_6(%arg0: i32) -> (i32, i32) {
    %c0_i32 = arith.constant 0 : i32
    %c0_i32_0 = arith.constant 0 : i32
    %c0_i32_1 = arith.constant 0 : i32
    return %c0_i32, %c0_i32_0 : i32, i32
  }
  func.func @transform_7(%arg0: i32) -> (i32, i32) {
    %c0_i32 = arith.constant 0 : i32
    %c0_i32_0 = arith.constant 0 : i32
    %c0_i32_1 = arith.constant 0 : i32
    return %c0_i32, %c0_i32_0 : i32, i32
  }
  func.func @transform_8(%arg0: i32) -> (i32, i32) {
    %c0_i32 = arith.constant 0 : i32
    %c0_i32_0 = arith.constant 0 : i32
    %c0_i32_1 = arith.constant 0 : i32
    return %c0_i32, %c0_i32_0 : i32, i32
  }
  func.func @transform_9(%arg0: i32) -> (i32, i32) {
    %c0_i32 = arith.constant 0 : i32
    %c0_i32_0 = arith.constant 0 : i32
    %c0_i32_1 = arith.constant 0 : i32
    return %c0_i32, %c0_i32_0 : i32, i32
  }
  func.func @transform_10(%arg0: i32) -> (i32, i32) {
    %c0_i32 = arith.constant 0 : i32
    %c0_i32_0 = arith.constant 0 : i32
    %c0_i32_1 = arith.constant 0 : i32
    return %c0_i32, %c0_i32_0 : i32, i32
  }
  func.func @transform_11(%arg0: i32) -> (i32, i32) {
    %c0_i32 = arith.constant 0 : i32
    %c0_i32_0 = arith.constant 0 : i32
    %c0_i32_1 = arith.constant 0 : i32
    return %c0_i32, %c0_i32_0 : i32, i32
  }
  func.func @transform_12(%arg0: i32) -> (i32, i32) {
    %c0_i32 = arith.constant 0 : i32
    %c0_i32_0 = arith.constant 0 : i32
    %c0_i32_1 = arith.constant 0 : i32
    return %c0_i32, %c0_i32_0 : i32, i32
  }
  func.func @transform_13(%arg0: i32) -> (i32, i32) {
    %c0_i32 = arith.constant 0 : i32
    %c0_i32_0 = arith.constant 0 : i32
    return %arg0, %c0_i32 : i32, i32
  }
}

</mosaic_0001>

<llo_original>
// kernel: tpu_custom_call.1
$region0: #{tpu_custom_call.1}
  #allocation0 [shape = 'u32[]', space=smem, size = 0x4, offset = 0x4, fixed_abs, tag = 'smem constant byte address 0x4 - core index']
  #allocation1 [shape = 'u32[144,128]{1,0:T(1,128)}', space=vmem, size = 0x12000, scoped, tag = 'internal scratch']
  %s0 = inlined_call_operand.vmem [shape: f32[112,34], index: 0, kind: input, shape index: {}]
  %s1 = inlined_call_operand.hbm [shape: bf16[34,512], index: 1, kind: input, shape index: {}]
  %s2 = inlined_call_operand.vmem [shape: f32[1,512], index: 2, kind: input, shape index: {}]
  %s3 = inlined_call_operand.hbm [shape: bf16[256,512], index: 3, kind: input, shape index: {}]
  %s4 = inlined_call_operand.vmem [shape: f32[1,512], index: 4, kind: input, shape index: {}]
  %s5 = inlined_call_operand.hbm [shape: bf16[256,512], index: 5, kind: input, shape index: {}]
  %s6 = inlined_call_operand.vmem [shape: f32[1,512], index: 6, kind: input, shape index: {}]
  %s7 = inlined_call_operand.hbm [shape: bf16[256,256], index: 7, kind: input, shape index: {}]
  %s8 = inlined_call_operand.vmem [shape: f32[1,256], index: 8, kind: input, shape index: {}]
  %s9 = inlined_call_operand.vmem [shape: bf16[256,128], index: 9, kind: input, shape index: {}]
  %s10 = inlined_call_operand.vmem [shape: f32[1,128], index: 10, kind: input, shape index: {}]
  %s11 = inlined_call_operand.hbm [shape: f32[128,128], index: 11, kind: input, shape index: {}]
  %s12 = inlined_call_operand.vmem [shape: f32[1,128], index: 12, kind: input, shape index: {}]
  %s13 = inlined_call_operand.hbm [shape: f32[112,128], index: 13, kind: output, shape index: {}]
  %s14 = sld [smem:[#allocation0]]
  $region105: #{tpu_custom_call.1} parent=0
    _
  %s16 = ssub.s32 1, %s14
  %s17 = scalar_select 0, %s16, %s14
  $region1: #{tpu_custom_call.1} parent=0
    #allocation2 [shape = 'u8[40960]{0}', space=vmem, size = 0xa000, scoped, tag = 'input window, operand 1, single buffered']
    #allocation3 [shape = 's32[2]{0}', space=sflag, size = 0x8, scoped, tag = 'scoped memory for tpu_custom_call.1']
    #allocation4 [shape = 's32[2]{0}', space=sflag, size = 0x8, scoped, tag = 'scoped memory for tpu_custom_call.1']
    #allocation5 [shape = 'u8[262144]{0}', space=vmem, size = 0x40000, scoped, tag = 'input window, operand 3, single buffered']
    #allocation6 [shape = 's32[1]{0}', space=sflag, size = 0x4, scoped, tag = 'scoped memory for tpu_custom_call.1']
    #allocation7 [shape = 'u8[262144]{0}', space=vmem, size = 0x40000, scoped, tag = 'input window, operand 5, single buffered']
    #allocation8 [shape = 'u8[131072]{0}', space=vmem, size = 0x20000, scoped, tag = 'input window, operand 7, single buffered']
    #allocation9 [shape = 's32[1]{0}', space=sflag, size = 0x4, scoped, tag = 'scoped memory for tpu_custom_call.1']
    #allocation10 [shape = 'u8[65536]{0}', space=vmem, size = 0x10000, scoped, tag = 'input window, operand 11, single buffered']
    #allocation11 [shape = 'u8[57344]{0}', space=vmem, size = 0xe000, scoped, tag = 'output window, operand 0']
    %18 = vsyncpa [#allocation3], 0
    %19 = vsyncpa [#allocation6], 0
    %20 = vsyncpa [#allocation9], 0
    %21 = vsyncpa [#allocation4], 0
    %s22 = scalar_lea.sflag [#allocation4], 1
    %23 = vsyncpa %s22, 0
    loop: start=0, step=1, limit=4
    $region2: #{tpu_custom_call.1} parent=1 // loop_pre_header
      _
    $region3: #{tpu_custom_call.1} parent=1 // loop_header
      %s25 = sphi 0, %s29
      %p26 = scmp.ge.s32.totalorder %s25, 4
      %s35 = sphi 0, %s37
      %s38 = sphi 0, %s35
      %s39 = sphi 0, %s38
      %s55 = sphi 0, %s39
      %s59 = sphi 0, %s59
      %s61 = sphi 0, %s59
      %s62 = sphi 0, %s61
      %s76 = sphi 0, %s62
      %s80 = sphi 0, %s80
      %s82 = sphi 0, %s80
      %s83 = sphi 0, %s82
      %s97 = sphi 0, %s83
      %s101 = sphi 0, %s101
      %s103 = sphi 0, %s101
      %s104 = sphi 0, %s103
      %s118 = sphi 0, %s104
      %s122 = sphi 0, %s122
      %s124 = sphi 0, %s122
      %s125 = sphi 0, %s124
      %s139 = sphi 0, %s125
      %s143 = sphi 0, %s143
      %s145 = sphi 0, %s143
      %s146 = sphi 0, %s145
      %s160 = sphi 0, %s146
      %s164 = sphi 0, %s164
      %s166 = sphi 0, %s164
      %s167 = sphi 0, %s166
      %s181 = sphi 0, %s167
      %s185 = sphi 0, %s185
      %s187 = sphi 0, %s185
      %s188 = sphi 0, %s187
      %s202 = sphi 0, %s188
      %s206 = sphi 0, %s206
      %s208 = sphi 0, %s206
      %s209 = sphi 0, %s208
      %s223 = sphi 0, %s209
      %s227 = sphi 0, %s227
      %s229 = sphi 0, %s227
      %s230 = sphi 0, %s229
      %s244 = sphi 0, %s230
      %s248 = sphi 0, %s248
      %s250 = sphi 0, %s248
      %s251 = sphi 0, %s250
      %s265 = sphi 0, %s251
      %s269 = sphi 0, %s269
      %s271 = sphi 0, %s269
      %s272 = sphi 0, %s271
      %s286 = sphi 0, %s272
      %s290 = sphi 0, %s290
      %s292 = sphi 0, %s290
      %s293 = sphi 0, %s292
      %s307 = sphi 0, %s293
      %s313 = sphi 0, %s315
      %s316 = sphi 0, %s313
      %s317 = sphi 0, %s316
      %s333 = sphi 0, %s317
    $region4: #{tpu_custom_call.1} parent=1 // loop_header_branch
      %28 = sbr.rel (%p26) target = $region8
    $region5: #{tpu_custom_call.1} parent=1 // loop_body
      %s30 = ssub.s32 %s25, 1
      %s31 = ssub.s32 %s25, 2
      %s32 = sadd.s32 %s25, 1
      %s33 = ssub.s32 %s25, %s32
      %p34 = scmp.eq.s32.totalorder %s33, 0
      %s36 = sadd.s32 %s35, 1
      %s37 = scalar_select %p34, %s35, %s36
      %p40 = pneg %p34
      %p41 = scmp.eq.s32.totalorder %s25, 1
      %p42 = por %p40, %p41
      %p43 = scmp.ne.s32.totalorder %s35, %s38
      %p44 = scmp.eq.s32.totalorder %s25, 0
      %p45 = por %p43, %p44
      %p46 = scmp.ne.s32.totalorder %s35, %s38
      %p47 = scmp.eq.s32.totalorder %s30, 1
      %p48 = por %p46, %p47
      %p49 = scmp.ne.s32.totalorder %s38, %s39
      %p50 = scmp.eq.s32.totalorder %s30, 0
      %p51 = por %p49, %p50
      %p52 = scmp.ne.s32.totalorder %s38, %s39
      %p53 = scmp.eq.s32.totalorder %s31, 1
      %p54 = por %p52, %p53
      %p56 = scmp.ne.s32.totalorder %s39, %s55
      %p57 = scmp.eq.s32.totalorder %s31, 0
      %p58 = por %p56, %p57
      %s60 = sadd.s32 %s59, 1
      %p63 = scmp.eq.s32.totalorder %s25, 1
      %p64 = scmp.ne.s32.totalorder %s59, %s61
      %p65 = scmp.eq.s32.totalorder %s25, 0
      %p66 = por %p64, %p65
      %p67 = scmp.ne.s32.totalorder %s59, %s61
      %p68 = scmp.eq.s32.totalorder %s30, 1
      %p69 = por %p67, %p68
      %p70 = scmp.ne.s32.totalorder %s61, %s62
      %p71 = scmp.eq.s32.totalorder %s30, 0
      %p72 = por %p70, %p71
      %p73 = scmp.ne.s32.totalorder %s61, %s62
      %p74 = scmp.eq.s32.totalorder %s31, 1
      %p75 = por %p73, %p74
      %p77 = scmp.ne.s32.totalorder %s62, %s76
      %p78 = scmp.eq.s32.totalorder %s31, 0
      %p79 = por %p77, %p78
      %s81 = sadd.s32 %s80, 1
      %p84 = scmp.eq.s32.totalorder %s25, 1
      %p85 = scmp.ne.s32.totalorder %s80, %s82
      %p86 = scmp.eq.s32.totalorder %s25, 0
      %p87 = por %p85, %p86
      %p88 = scmp.ne.s32.totalorder %s80, %s82
      %p89 = scmp.eq.s32.totalorder %s30, 1
      %p90 = por %p88, %p89
      %p91 = scmp.ne.s32.totalorder %s82, %s83
      %p92 = scmp.eq.s32.totalorder %s30, 0
      %p93 = por %p91, %p92
      %p94 = scmp.ne.s32.totalorder %s82, %s83
      %p95 = scmp.eq.s32.totalorder %s31, 1
      %p96 = por %p94, %p95
      %p98 = scmp.ne.s32.totalorder %s83, %s97
      %p99 = scmp.eq.s32.totalorder %s31, 0
      %p100 = por %p98, %p99
      %s102 = sadd.s32 %s101, 1
      %p105 = scmp.eq.s32.totalorder %s25, 1
      %p106 = scmp.ne.s32.totalorder %s101, %s103
      %p107 = scmp.eq.s32.totalorder %s25, 0
      %p108 = por %p106, %p107
      %p109 = scmp.ne.s32.totalorder %s101, %s103
      %p110 = scmp.eq.s32.totalorder %s30, 1
      %p111 = por %p109, %p110
      %p112 = scmp.ne.s32.totalorder %s103, %s104
      %p113 = scmp.eq.s32.totalorder %s30, 0
      %p114 = por %p112, %p113
      %p115 = scmp.ne.s32.totalorder %s103, %s104
      %p116 = scmp.eq.s32.totalorder %s31, 1
      %p117 = por %p115, %p116
      %p119 = scmp.ne.s32.totalorder %s104, %s118
      %p120 = scmp.eq.s32.totalorder %s31, 0
      %p121 = por %p119, %p120
      %s123 = sadd.s32 %s122, 1
      %p126 = scmp.eq.s32.totalorder %s25, 1
      %p127 = scmp.ne.s32.totalorder %s122, %s124
      %p128 = scmp.eq.s32.totalorder %s25, 0
      %p129 = por %p127, %p128
      %p130 = scmp.ne.s32.totalorder %s122, %s124
      %p131 = scmp.eq.s32.totalorder %s30, 1
      %p132 = por %p130, %p131
      %p133 = scmp.ne.s32.totalorder %s124, %s125
      %p134 = scmp.eq.s32.totalorder %s30, 0
      %p135 = por %p133, %p134
      %p136 = scmp.ne.s32.totalorder %s124, %s125
      %p137 = scmp.eq.s32.totalorder %s31, 1
      %p138 = por %p136, %p137
      %p140 = scmp.ne.s32.totalorder %s125, %s139
      %p141 = scmp.eq.s32.totalorder %s31, 0
      %p142 = por %p140, %p141
      %s144 = sadd.s32 %s143, 1
      %p147 = scmp.eq.s32.totalorder %s25, 1
      %p148 = scmp.ne.s32.totalorder %s143, %s145
      %p149 = scmp.eq.s32.totalorder %s25, 0
      %p150 = por %p148, %p149
      %p151 = scmp.ne.s32.totalorder %s143, %s145
      %p152 = scmp.eq.s32.totalorder %s30, 1
      %p153 = por %p151, %p152
      %p154 = scmp.ne.s32.totalorder %s145, %s146
      %p155 = scmp.eq.s32.totalorder %s30, 0
      %p156 = por %p154, %p155
      %p157 = scmp.ne.s32.totalorder %s145, %s146
      %p158 = scmp.eq.s32.totalorder %s31, 1
      %p159 = por %p157, %p158
      %p161 = scmp.ne.s32.totalorder %s146, %s160
      %p162 = scmp.eq.s32.totalorder %s31, 0
      %p163 = por %p161, %p162
      %s165 = sadd.s32 %s164, 1
      %p168 = scmp.eq.s32.totalorder %s25, 1
      %p169 = scmp.ne.s32.totalorder %s164, %s166
      %p170 = scmp.eq.s32.totalorder %s25, 0
      %p171 = por %p169, %p170
      %p172 = scmp.ne.s32.totalorder %s164, %s166
      %p173 = scmp.eq.s32.totalorder %s30, 1
      %p174 = por %p172, %p173
      %p175 = scmp.ne.s32.totalorder %s166, %s167
      %p176 = scmp.eq.s32.totalorder %s30, 0
      %p177 = por %p175, %p176
      %p178 = scmp.ne.s32.totalorder %s166, %s167
      %p179 = scmp.eq.s32.totalorder %s31, 1
      %p180 = por %p178, %p179
      %p182 = scmp.ne.s32.totalorder %s167, %s181
      %p183 = scmp.eq.s32.totalorder %s31, 0
      %p184 = por %p182, %p183
      %s186 = sadd.s32 %s185, 1
      %p189 = scmp.eq.s32.totalorder %s25, 1
      %p190 = scmp.ne.s32.totalorder %s185, %s187
      %p191 = scmp.eq.s32.totalorder %s25, 0
      %p192 = por %p190, %p191
      %p193 = scmp.ne.s32.totalorder %s185, %s187
      %p194 = scmp.eq.s32.totalorder %s30, 1
      %p195 = por %p193, %p194
      %p196 = scmp.ne.s32.totalorder %s187, %s188
      %p197 = scmp.eq.s32.totalorder %s30, 0
      %p198 = por %p196, %p197
      %p199 = scmp.ne.s32.totalorder %s187, %s188
      %p200 = scmp.eq.s32.totalorder %s31, 1
      %p201 = por %p199, %p200
      %p203 = scmp.ne.s32.totalorder %s188, %s202
      %p204 = scmp.eq.s32.totalorder %s31, 0
      %p205 = por %p203, %p204
      %s207 = sadd.s32 %s206, 1
      %p210 = scmp.eq.s32.totalorder %s25, 1
      %p211 = scmp.ne.s32.totalorder %s206, %s208
      %p212 = scmp.eq.s32.totalorder %s25, 0
      %p213 = por %p211, %p212
      %p214 = scmp.ne.s32.totalorder %s206, %s208
      %p215 = scmp.eq.s32.totalorder %s30, 1
      %p216 = por %p214, %p215
      %p217 = scmp.ne.s32.totalorder %s208, %s209
      %p218 = scmp.eq.s32.totalorder %s30, 0
      %p219 = por %p217, %p218
      %p220 = scmp.ne.s32.totalorder %s208, %s209
      %p221 = scmp.eq.s32.totalorder %s31, 1
      %p222 = por %p220, %p221
      %p224 = scmp.ne.s32.totalorder %s209, %s223
      %p225 = scmp.eq.s32.totalorder %s31, 0
      %p226 = por %p224, %p225
      %s228 = sadd.s32 %s227, 1
      %p231 = scmp.eq.s32.totalorder %s25, 1
      %p232 = scmp.ne.s32.totalorder %s227, %s229
      %p233 = scmp.eq.s32.totalorder %s25, 0
      %p234 = por %p232, %p233
      %p235 = scmp.ne.s32.totalorder %s227, %s229
      %p236 = scmp.eq.s32.totalorder %s30, 1
      %p237 = por %p235, %p236
      %p238 = scmp.ne.s32.totalorder %s229, %s230
      %p239 = scmp.eq.s32.totalorder %s30, 0
      %p240 = por %p238, %p239
      %p241 = scmp.ne.s32.totalorder %s229, %s230
      %p242 = scmp.eq.s32.totalorder %s31, 1
      %p243 = por %p241, %p242
      %p245 = scmp.ne.s32.totalorder %s230, %s244
      %p246 = scmp.eq.s32.totalorder %s31, 0
      %p247 = por %p245, %p246
      %s249 = sadd.s32 %s248, 1
      %p252 = scmp.eq.s32.totalorder %s25, 1
      %p253 = scmp.ne.s32.totalorder %s248, %s250
      %p254 = scmp.eq.s32.totalorder %s25, 0
      %p255 = por %p253, %p254
      %p256 = scmp.ne.s32.totalorder %s248, %s250
      %p257 = scmp.eq.s32.totalorder %s30, 1
      %p258 = por %p256, %p257
      %p259 = scmp.ne.s32.totalorder %s250, %s251
      %p260 = scmp.eq.s32.totalorder %s30, 0
      %p261 = por %p259, %p260
      %p262 = scmp.ne.s32.totalorder %s250, %s251
      %p263 = scmp.eq.s32.totalorder %s31, 1
      %p264 = por %p262, %p263
      %p266 = scmp.ne.s32.totalorder %s251, %s265
      %p267 = scmp.eq.s32.totalorder %s31, 0
      %p268 = por %p266, %p267
      %s270 = sadd.s32 %s269, 1
      %p273 = scmp.eq.s32.totalorder %s25, 1
      %p274 = scmp.ne.s32.totalorder %s269, %s271
      %p275 = scmp.eq.s32.totalorder %s25, 0
      %p276 = por %p274, %p275
      %p277 = scmp.ne.s32.totalorder %s269, %s271
      %p278 = scmp.eq.s32.totalorder %s30, 1
      %p279 = por %p277, %p278
      %p280 = scmp.ne.s32.totalorder %s271, %s272
      %p281 = scmp.eq.s32.totalorder %s30, 0
      %p282 = por %p280, %p281
      %p283 = scmp.ne.s32.totalorder %s271, %s272
      %p284 = scmp.eq.s32.totalorder %s31, 1
      %p285 = por %p283, %p284
      %p287 = scmp.ne.s32.totalorder %s272, %s286
      %p288 = scmp.eq.s32.totalorder %s31, 0
      %p289 = por %p287, %p288
      %s291 = sadd.s32 %s290, 1
      %p294 = scmp.eq.s32.totalorder %s25, 1
      %p295 = scmp.ne.s32.totalorder %s290, %s292
      %p296 = scmp.eq.s32.totalorder %s25, 0
      %p297 = por %p295, %p296
      %p298 = scmp.ne.s32.totalorder %s290, %s292
      %p299 = scmp.eq.s32.totalorder %s30, 1
      %p300 = por %p298, %p299
      %p301 = scmp.ne.s32.totalorder %s292, %s293
      %p302 = scmp.eq.s32.totalorder %s30, 0
      %p303 = por %p301, %p302
      %p304 = scmp.ne.s32.totalorder %s292, %s293
      %p305 = scmp.eq.s32.totalorder %s31, 1
      %p306 = por %p304, %p305
      %p308 = scmp.ne.s32.totalorder %s293, %s307
      %p309 = scmp.eq.s32.totalorder %s31, 0
      %p310 = por %p308, %p309
      %s311 = ssub.s32 %s25, %s32
      %p312 = scmp.eq.s32.totalorder %s311, 0
      %s314 = sadd.s32 %s313, 1
      %s315 = scalar_select %p312, %s313, %s314
      %p318 = pneg %p312
      %p319 = scmp.eq.s32.totalorder %s25, 1
      %p320 = por %p318, %p319
      %p321 = scmp.ne.s32.totalorder %s313, %s316
      %p322 = scmp.eq.s32.totalorder %s25, 0
      %p323 = por %p321, %p322
      %p324 = scmp.ne.s32.totalorder %s313, %s316
      %p325 = scmp.eq.s32.totalorder %s30, 1
      %p326 = por %p324, %p325
      %p327 = scmp.ne.s32.totalorder %s316, %s317
      %p328 = scmp.eq.s32.totalorder %s30, 0
      %p329 = por %p327, %p328
      %p330 = scmp.ne.s32.totalorder %s316, %s317
      %p331 = scmp.eq.s32.totalorder %s31, 1
      %p332 = por %p330, %p331
      %p334 = scmp.ne.s32.totalorder %s317, %s333
      %p335 = scmp.eq.s32.totalorder %s31, 0
      %p336 = por %p334, %p335
      %p337 = scmp.le.s32.totalorder 1, %s25
      %p338 = scmp.lt.s32.totalorder %s25, 3
      %p339 = pnand %p337, %p338
      %p340 = pneg %p339
      // Predicated region
      $region9: #{tpu_custom_call.1} parent=5 // pred_check
        _
      $region10: #{tpu_custom_call.1} parent=5 // pred_check_branch
        %342 = sbr.rel (%p339) target = $region12
      $region11: #{tpu_custom_call.1} parent=5 // pred_region
        %s343 = ssub.s32 %s25, 1
        // Predicated region
        $region13: #{tpu_custom_call.1} parent=11 // pred_check
          %p344 = pneg %p72
        $region14: #{tpu_custom_call.1} parent=11 // pred_check_branch
          %346 = sbr.rel (%p344) target = $region16
        $region15: #{tpu_custom_call.1} parent=11 // pred_region
          %s348 = ssub.s32 1280, 1280
          %349 = vsyncadd [#allocation3], %s348
          %s350 = sshll.u32 [#allocation2], 4
          %s351 = int_to_ptr.vmem [resolvable:$true] %s350
          %356 = dma.hbm_to_vmem [thread:$0]  %s1, 1280, %s351, [#allocation3], 256, 256, 16
        $region16: #{tpu_custom_call.1} parent=11 // pred_fallthru
          _
        // Predicated region
        $region17: #{tpu_custom_call.1} parent=11 // pred_check
          %p357 = pneg %p93
        $region18: #{tpu_custom_call.1} parent=11 // pred_check_branch
          %359 = sbr.rel (%p357) target = $region20
        $region19: #{tpu_custom_call.1} parent=11 // pred_region
          _
        $region20: #{tpu_custom_call.1} parent=11 // pred_fallthru
          _
        // Predicated region
        $region21: #{tpu_custom_call.1} parent=11 // pred_check
          %p360 = pneg %p114
        $region22: #{tpu_custom_call.1} parent=11 // pred_check_branch
          %362 = sbr.rel (%p360) target = $region24
        $region23: #{tpu_custom_call.1} parent=11 // pred_region
          %s364 = ssub.s32 8192, 8192
          %365 = vsyncadd [#allocation6], %s364
          %s366 = sshll.u32 [#allocation5], 4
          %s367 = int_to_ptr.vmem [resolvable:$true] %s366
          %372 = dma.hbm_to_vmem [thread:$0]  %s3, 8192, %s367, [#allocation6], 256, 256, 16
        $region24: #{tpu_custom_call.1} parent=11 // pred_fallthru
          _
        // Predicated region
        $region25: #{tpu_custom_call.1} parent=11 // pred_check
          %p373 = pneg %p135
        $region26: #{tpu_custom_call.1} parent=11 // pred_check_branch
          %375 = sbr.rel (%p373) target = $region28
        $region27: #{tpu_custom_call.1} parent=11 // pred_region
          _
        $region28: #{tpu_custom_call.1} parent=11 // pred_fallthru
          _
        // Predicated region
        $region29: #{tpu_custom_call.1} parent=11 // pred_check
          %p376 = pneg %p156
        $region30: #{tpu_custom_call.1} parent=11 // pred_check_branch
          %378 = sbr.rel (%p376) target = $region32
        $region31: #{tpu_custom_call.1} parent=11 // pred_region
          %s380 = ssub.s32 8192, 8192
          %381 = vsyncadd [#allocation6], %s380
          %s382 = sshll.u32 [#allocation7], 4
          %s383 = int_to_ptr.vmem [resolvable:$true] %s382
          %388 = dma.hbm_to_vmem [thread:$0]  %s5, 8192, %s383, [#allocation6], 256, 256, 16
        $region32: #{tpu_custom_call.1} parent=11 // pred_fallthru
          _
        // Predicated region
        $region33: #{tpu_custom_call.1} parent=11 // pred_check
          %p389 = pneg %p177
        $region34: #{tpu_custom_call.1} parent=11 // pred_check_branch
          %391 = sbr.rel (%p389) target = $region36
        $region35: #{tpu_custom_call.1} parent=11 // pred_region
          _
        $region36: #{tpu_custom_call.1} parent=11 // pred_fallthru
          _
        // Predicated region
        $region37: #{tpu_custom_call.1} parent=11 // pred_check
          %p392 = pneg %p198
        $region38: #{tpu_custom_call.1} parent=11 // pred_check_branch
          %394 = sbr.rel (%p392) target = $region40
        $region39: #{tpu_custom_call.1} parent=11 // pred_region
          %s396 = ssub.s32 4096, 4096
          %397 = vsyncadd [#allocation9], %s396
          %s398 = sshll.u32 [#allocation8], 4
          %s399 = int_to_ptr.vmem [resolvable:$true] %s398
          %404 = dma.hbm_to_vmem [thread:$0]  %s7, 4096, %s399, [#allocation9], 128, 128, 8
        $region40: #{tpu_custom_call.1} parent=11 // pred_fallthru
          _
        // Predicated region
        $region41: #{tpu_custom_call.1} parent=11 // pred_check
          %p405 = pneg %p219
        $region42: #{tpu_custom_call.1} parent=11 // pred_check_branch
          %407 = sbr.rel (%p405) target = $region44
        $region43: #{tpu_custom_call.1} parent=11 // pred_region
          _
        $region44: #{tpu_custom_call.1} parent=11 // pred_fallthru
          _
        // Predicated region
        $region45: #{tpu_custom_call.1} parent=11 // pred_check
          %p408 = pneg %p240
        $region46: #{tpu_custom_call.1} parent=11 // pred_check_branch
          %410 = sbr.rel (%p408) target = $region48
        $region47: #{tpu_custom_call.1} parent=11 // pred_region
          _
        $region48: #{tpu_custom_call.1} parent=11 // pred_fallthru
          _
        // Predicated region
        $region49: #{tpu_custom_call.1} parent=11 // pred_check
          %p411 = pneg %p261
        $region50: #{tpu_custom_call.1} parent=11 // pred_check_branch
          %413 = sbr.rel (%p411) target = $region52
        $region51: #{tpu_custom_call.1} parent=11 // pred_region
          _
        $region52: #{tpu_custom_call.1} parent=11 // pred_fallthru
          _
        // Predicated region
        $region53: #{tpu_custom_call.1} parent=11 // pred_check
          %p414 = pneg %p282
        $region54: #{tpu_custom_call.1} parent=11 // pred_check_branch
          %416 = sbr.rel (%p414) target = $region56
        $region55: #{tpu_custom_call.1} parent=11 // pred_region
          %s418 = ssub.s32 2048, 2048
          %419 = vsyncadd [#allocation9], %s418
          %s420 = sshll.u32 [#allocation10], 4
          %s421 = int_to_ptr.vmem [resolvable:$true] %s420
          %426 = dma.hbm_to_vmem [thread:$0]  %s11, 2048, %s421, [#allocation9], 128, 128, 8
        $region56: #{tpu_custom_call.1} parent=11 // pred_fallthru
          _
        // Predicated region
        $region57: #{tpu_custom_call.1} parent=11 // pred_check
          %p427 = pneg %p303
        $region58: #{tpu_custom_call.1} parent=11 // pred_check_branch
          %429 = sbr.rel (%p427) target = $region60
        $region59: #{tpu_custom_call.1} parent=11 // pred_region
          _
        $region60: #{tpu_custom_call.1} parent=11 // pred_fallthru
          _
      $region12: #{tpu_custom_call.1} parent=5 // pred_fallthru
        _
      %p430 = scmp.lt.s32.totalorder %s25, 2
      // Predicated region
      $region61: #{tpu_custom_call.1} parent=5 // pred_check
        %p431 = pneg %p430
      $region62: #{tpu_custom_call.1} parent=5 // pred_check_branch
        %433 = sbr.rel (%p431) target = $region64
      $region63: #{tpu_custom_call.1} parent=5 // pred_region
        // Predicated region
        $region65: #{tpu_custom_call.1} parent=63 // pred_check
          %p434 = pneg %p45
        $region66: #{tpu_custom_call.1} parent=63 // pred_check_branch
          %436 = sbr.rel (%p434) target = $region68
        $region67: #{tpu_custom_call.1} parent=63 // pred_region
          %s437 = smul.u32 7, %s25
          %p438 = scmp.lt.s32.totalorder %s437, 13
          %s439 = scalar_select %p438, %s437, 13
          %s440 = smul.addr %s439, 8
          %s441 = scalar_lea.vmem %s0, %s440
          %s442 = smul.u32 7, %s25
        $region68: #{tpu_custom_call.1} parent=63 // pred_fallthru
          _
      $region64: #{tpu_custom_call.1} parent=5 // pred_fallthru
        _
      %p443 = scmp.le.s32.totalorder 1, %s25
      %p444 = scmp.lt.s32.totalorder %s25, 3
      %p445 = pnand %p443, %p444
      %p446 = pneg %p445
      // Predicated region
      $region69: #{tpu_custom_call.1} parent=5 // pred_check
        _
      $region70: #{tpu_custom_call.1} parent=5 // pred_check_branch
        %448 = sbr.rel (%p445) target = $region72
      $region71: #{tpu_custom_call.1} parent=5 // pred_region
        %s449 = ssub.s32 %s25, 1
        // Predicated region
        $region73: #{tpu_custom_call.1} parent=71 // pred_check
          %p450 = pneg %p72
        $region74: #{tpu_custom_call.1} parent=71 // pred_check_branch
          %452 = sbr.rel (%p450) target = $region76
        $region75: #{tpu_custom_call.1} parent=71 // pred_region
          %453 = dma.done [#allocation3], 1280
        $region76: #{tpu_custom_call.1} parent=71 // pred_fallthru
          _
        // Predicated region
        $region77: #{tpu_custom_call.1} parent=71 // pred_check
          %p454 = pneg %p114
        $region78: #{tpu_custom_call.1} parent=71 // pred_check_branch
          %456 = sbr.rel (%p454) target = $region80
        $region79: #{tpu_custom_call.1} parent=71 // pred_region
          %457 = dma.done [#allocation6], 8192
        $region80: #{tpu_custom_call.1} parent=71 // pred_fallthru
          _
        // Predicated region
        $region81: #{tpu_custom_call.1} parent=71 // pred_check
          %p458 = pneg %p156
        $region82: #{tpu_custom_call.1} parent=71 // pred_check_branch
          %460 = sbr.rel (%p458) target = $region84
        $region83: #{tpu_custom_call.1} parent=71 // pred_region
          %461 = dma.done [#allocation6], 8192
        $region84: #{tpu_custom_call.1} parent=71 // pred_fallthru
          _
        // Predicated region
        $region85: #{tpu_custom_call.1} parent=71 // pred_check
          %p462 = pneg %p198
        $region86: #{tpu_custom_call.1} parent=71 // pred_check_branch
          %464 = sbr.rel (%p462) target = $region88
        $region87: #{tpu_custom_call.1} parent=71 // pred_region
          %465 = dma.done [#allocation9], 4096
        $region88: #{tpu_custom_call.1} parent=71 // pred_fallthru
          _
        // Predicated region
        $region89: #{tpu_custom_call.1} parent=71 // pred_check
          %p466 = pneg %p282
        $region90: #{tpu_custom_call.1} parent=71 // pred_check_branch
          %468 = sbr.rel (%p466) target = $region92
        $region91: #{tpu_custom_call.1} parent=71 // pred_region
          %469 = dma.done [#allocation9], 2048
        $region92: #{tpu_custom_call.1} parent=71 // pred_fallthru
          _
        %s470 = smul.u32 7, %s30
        %p471 = scmp.lt.s32.totalorder %s470, 13
        %s472 = scalar_select %p471, %s470, 13
        %s473 = smul.addr %s472, 8
        %s474 = scalar_lea.vmem %s0, %s473
        %p475 = pneg %p51
        %p476 = pneg %p48
        %p477 = pneg %p72
        %p478 = pneg %p69
        %p479 = pneg %p93
        %p480 = pneg %p90
        %p481 = pneg %p114
        %p482 = pneg %p111
        %p483 = pneg %p135
        %p484 = pneg %p132
        %p485 = pneg %p156
        %p486 = pneg %p153
        %p487 = pneg %p177
        %p488 = pneg %p174
        %p489 = pneg %p198
        %p490 = pneg %p195
        %p491 = pneg %p219
        %p492 = pneg %p216
        %p493 = pneg %p240
        %p494 = pneg %p237
        %p495 = pneg %p261
        %p496 = pneg %p258
        %p497 = pneg %p282
        %p498 = pneg %p279
        %p499 = pneg %p303
        %p500 = pneg %p300
        %p501 = pneg %p329
        %p502 = pneg %p326
        %s503 = sand.u32 %s316, 1
        %s504 = scalar_lea.sflag [#allocation4], %s503
        %s505 = sand.u32 %s316, 1
        %s506 = smul.addr %s505, 56
        %s507 = scalar_lea.vmem [#allocation11], %s506
        %s508 = smul.u32 7, %s30
        %p509 = scmp.lt.s32.totalorder %s508, 13
        %s510 = scalar_select %p509, %s508, 13
        %s511 = smul.addr %s510, 8
        %s512 = scalar_lea.vmem %s0, %s511
        %s513 = smul.u32 7, %s30
        %s514 = smul.u32 7, %s30
        %v516 = vld [vmem:[%s512] sm:$0xff]
        %v517 = vld [vmem:[%s512 + $0x8] sm:$0xff]
        %v518 = vld [vmem:[%s512 + $0x10] sm:$0xff]
        %v519 = vld [vmem:[%s512 + $0x18] sm:$0xff]
        %v520 = vld [vmem:[%s512 + $0x20] sm:$0xff]
        %v521 = vld [vmem:[%s512 + $0x28] sm:$0xff]
        %v522 = vld [vmem:[%s512 + $0x30] sm:$0xff]
        %v523 = vpack.c.bf16 %v517, %v516
        %v524 = vpack.c.bf16 %v519, %v518
        %v525 = vpack.c.bf16 %v521, %v520
        %v526 = vpack.c.bf16 %v522, %v522
        %v527 = vld [vmem:[#allocation2] sm:$0xff]
        %v528 = vld [vmem:[#allocation2 + $0x8] sm:$0xff]
        %v529 = vld [vmem:[#allocation2 + $0x10] sm:$0xff]
        %v530 = vld [vmem:[#allocation2 + $0x18] sm:$0xff]
        %v531 = vld [vmem:[#allocation2 + $0x20] sm:$0xff]
        %v532 = vld [vmem:[#allocation2 + $0x28] sm:$0xff]
        %v533 = vld [vmem:[#allocation2 + $0x30] sm:$0xff]
        %v534 = vld [vmem:[#allocation2 + $0x38] sm:$0xff]
        %v535 = vld [vmem:[#allocation2 + $0x40] sm:$0x11]
        %v536 = vld [vmem:[#allocation2 + $0x48] sm:$0x11]
        %v537 = vld [vmem:[%s2] sm:$0xf]
        %v539 = vlaneseq
        %v540 = vshrl.u32 %v539, 7
        %v541 = vsub.s32 0, %v540
        %v542 = vrot.slane %v537, %v541
        %v543 = vlaneseq
        %v544 = vshrl.u32 %v543, 7
        %v545 = vsub.s32 1, %v544
        %v546 = vrot.slane %v537, %v545
        %v547 = vlaneseq
        %v548 = vshrl.u32 %v547, 7
        %v549 = vsub.s32 2, %v548
        %v550 = vrot.slane %v537, %v549
        %v551 = vlaneseq
        %v552 = vshrl.u32 %v551, 7
        %v553 = vsub.s32 3, %v552
        %v554 = vrot.slane %v537, %v553
        %v569 = vunpack.c.l.b16 %v527
        %v570 = vunpack.c.h.b16 %v527
        %v571 = vunpack.c.l.b16 %v528
        %v572 = vunpack.c.h.b16 %v528
        %v573 = vunpack.c.l.b16 %v529
        %v574 = vunpack.c.h.b16 %v529
        %v575 = vunpack.c.l.b16 %v530
        %v576 = vunpack.c.h.b16 %v530
        %v577 = vunpack.c.l.b16 %v531
        %v578 = vunpack.c.h.b16 %v531
        %v579 = vunpack.c.l.b16 %v532
        %v580 = vunpack.c.h.b16 %v532
        %v581 = vunpack.c.l.b16 %v533
        %v582 = vunpack.c.h.b16 %v533
        %v583 = vunpack.c.l.b16 %v534
        %v584 = vunpack.c.h.b16 %v534
        %v585 = vunpack.c.l.b16 %v535
        %v586 = vunpack.c.h.b16 %v535
        %v587 = vunpack.c.l.b16 %v536
        %v588 = vunpack.c.h.b16 %v536
        %v589 = vpack.c.b16 %v573, %v569
        %v590 = vpack.c.b16 %v574, %v570
        %v591 = vpack.c.b16 %v575, %v571
        %v592 = vpack.c.b16 %v576, %v572
        %v593 = vpack.c.b16 %v581, %v577
        %v594 = vpack.c.b16 %v582, %v578
        %v595 = vpack.c.b16 %v583, %v579
        %v596 = vpack.c.b16 %v584, %v580
        %v597 = vpack.c.b16 %v585, %v585
        %v598 = vpack.c.b16 %v586, %v586
        %v599 = vpack.c.b16 %v587, %v587
        %v600 = vpack.c.b16 %v588, %v588
        %vm609 = vcmask 277504
        %v611 = vsel %vm609, %v523, 0
        %v614 = vsel %vm609, %v524, 0
        %v617 = vsel %vm609, %v525, 0
        %v620 = vsel %vm609, %v526, 0
        %vm622 = vcmask 1040384
        %v624 = vsel %vm622, %v597, 0
        %v627 = vsel %vm622, %v598, 0
        %v630 = vsel %vm622, %v599, 0
        %v633 = vsel %vm622, %v600, 0
        %635 = vmatprep.subr.bf16.mxu0 %v590
        %636 = vmatpush1.bf16.msra.mxu0 %v589
        %637 = vmatprep.subr.bf16.mxu0 %v594
        %638 = vmatpush1.bf16.msra.mxu0 %v593
        %639 = vmatprep.subr.bf16.mxu0 %v627
        %640 = vmatpush1.bf16.msra.mxu0 %v624
        %641 = vmatprep.subr.bf16.mxu0 0
        %642 = vmatpush1.bf16.msra.mxu0 0
        %643 = vmatprep.subr.bf16.mxu0 0
        %644 = vmatpush1.bf16.msra.mxu0 0
        %645 = vmatprep.subr.bf16.mxu0 0
        %646 = vmatpush1.bf16.msra.mxu0 0
        %647 = vmatprep.subr.bf16.mxu0 0
        %648 = vmatpush1.bf16.msra.mxu0 0
        %649 = vmatprep.subr.bf16.mxu0 0
        %650 = vmatpush1.bf16.msra.mxu0 0
        %651 = vmatprep.subr.bf16.mxu0 0
        %652 = vmatpush1.bf16.msra.mxu0 0
        %653 = vmatprep.subr.bf16.mxu0 0
        %654 = vmatpush1.bf16.msra.mxu0 0
        %655 = vmatprep.subr.bf16.mxu0 0
        %656 = vmatpush1.bf16.msra.mxu0 0
        %657 = vmatprep.subr.bf16.mxu0 0
        %658 = vmatpush1.bf16.msra.mxu0 0
        %659 = vmatprep.subr.bf16.mxu0 0
        %660 = vmatpush1.bf16.msra.mxu0 0
        %661 = vmatprep.subr.bf16.mxu0 0
        %662 = vmatpush1.bf16.msra.mxu0 0
        %663 = vmatprep.subr.bf16.mxu0 0
        %664 = vmatpush1.bf16.msra.mxu0 0
        %665 = vmatprep.subr.bf16.mxu0 0
        %666 = vmatpush1.bf16.msra.mxu0 0
        %667 = vmatprep.mubr.bf16.mxu0 0
        %668 = vmatmul.mubr.bf16.gmra.mrb[0].mxu0 %v611
        %v669 = vpop.f32.mrb[0].mxu0
        %v670 = vadd.f32 %v542, %v669
        %v671 = vpop.f32.mrb[0].mxu0
        %v672 = vadd.f32 %v546, %v671
        %v673 = vpop.f32.mrb[0].mxu0
        %v674 = vadd.f32 %v542, %v673
        %v675 = vpop.f32.mrb[0].mxu0
        %v676 = vadd.f32 %v546, %v675
        %677 = vmatprep.mubr.bf16.mxu0 0
        %678 = vmatmul.mubr.bf16.gmra.mrb[0].mxu0 %v614
        %v679 = vpop.f32.mrb[0].mxu0
        %v680 = vadd.f32 %v542, %v679
        %v681 = vpop.f32.mrb[0].mxu0
        %v682 = vadd.f32 %v546, %v681
        %v683 = vpop.f32.mrb[0].mxu0
        %v684 = vadd.f32 %v542, %v683
        %v685 = vpop.f32.mrb[0].mxu0
        %v686 = vadd.f32 %v546, %v685
        %687 = vmatprep.mubr.bf16.mxu0 0
        %688 = vmatmul.mubr.bf16.gmra.mrb[0].mxu0 %v617
        %v689 = vpop.f32.mrb[0].mxu0
        %v690 = vadd.f32 %v542, %v689
        %v691 = vpop.f32.mrb[0].mxu0
        %v692 = vadd.f32 %v546, %v691
        %v693 = vpop.f32.mrb[0].mxu0
        %v694 = vadd.f32 %v542, %v693
        %v695 = vpop.f32.mrb[0].mxu0
        %v696 = vadd.f32 %v546, %v695
        %697 = vmatprep.mubr.bf16.mxu0 0
        %698 = vmatmul.mubr.bf16.gmra.mrb[0].mxu0 %v620
        %v699 = vpop.f32.mrb[0].mxu0
        %v700 = vadd.f32 %v542, %v699
        %v701 = vpop.f32.mrb[0].mxu0
        %v702 = vadd.f32 %v546, %v701
        %v703 = vpop.f32.mrb[0].mxu0
        %v704 = vpop.f32.mrb[0].mxu0
        %705 = vdwg.mxu0
        %706 = vmatprep.subr.bf16.mxu0 %v592
        %707 = vmatpush1.bf16.msra.mxu0 %v591
        %708 = vmatprep.subr.bf16.mxu0 %v596
        %709 = vmatpush1.bf16.msra.mxu0 %v595
        %710 = vmatprep.subr.bf16.mxu0 %v633
        %711 = vmatpush1.bf16.msra.mxu0 %v630
        %712 = vmatprep.subr.bf16.mxu0 0
        %713 = vmatpush1.bf16.msra.mxu0 0
        %714 = vmatprep.subr.bf16.mxu0 0
        %715 = vmatpush1.bf16.msra.mxu0 0
        %716 = vmatprep.subr.bf16.mxu0 0
        %717 = vmatpush1.bf16.msra.mxu0 0
        %718 = vmatprep.subr.bf16.mxu0 0
        %719 = vmatpush1.bf16.msra.mxu0 0
        %720 = vmatprep.subr.bf16.mxu0 0
        %721 = vmatpush1.bf16.msra.mxu0 0
        %722 = vmatprep.subr.bf16.mxu0 0
        %723 = vmatpush1.bf16.msra.mxu0 0
        %724 = vmatprep.subr.bf16.mxu0 0
        %725 = vmatpush1.bf16.msra.mxu0 0
        %726 = vmatprep.subr.bf16.mxu0 0
        %727 = vmatpush1.bf16.msra.mxu0 0
        %728 = vmatprep.subr.bf16.mxu0 0
        %729 = vmatpush1.bf16.msra.mxu0 0
        %730 = vmatprep.subr.bf16.mxu0 0
        %731 = vmatpush1.bf16.msra.mxu0 0
        %732 = vmatprep.subr.bf16.mxu0 0
        %733 = vmatpush1.bf16.msra.mxu0 0
        %734 = vmatprep.subr.bf16.mxu0 0
        %735 = vmatpush1.bf16.msra.mxu0 0
        %736 = vmatprep.subr.bf16.mxu0 0
        %737 = vmatpush1.bf16.msra.mxu0 0
        %738 = vmatprep.mubr.bf16.mxu0 0
        %739 = vmatmul.mubr.bf16.gmra.mrb[0].mxu0 %v611
        %v740 = vpop.f32.mrb[0].mxu0
        %v741 = vadd.f32 %v550, %v740
        %v742 = vpop.f32.mrb[0].mxu0
        %v743 = vadd.f32 %v554, %v742
        %v744 = vpop.f32.mrb[0].mxu0
        %v745 = vadd.f32 %v550, %v744
        %v746 = vpop.f32.mrb[0].mxu0
        %v747 = vadd.f32 %v554, %v746
        %748 = vmatprep.mubr.bf16.mxu0 0
        %749 = vmatmul.mubr.bf16.gmra.mrb[0].mxu0 %v614
        %v750 = vpop.f32.mrb[0].mxu0
        %v751 = vadd.f32 %v550, %v750
        %v752 = vpop.f32.mrb[0].mxu0
        %v753 = vadd.f32 %v554, %v752
        %v754 = vpop.f32.mrb[0].mxu0
        %v755 = vadd.f32 %v550, %v754
        %v756 = vpop.f32.mrb[0].mxu0
        %v757 = vadd.f32 %v554, %v756
        %758 = vmatprep.mubr.bf16.mxu0 0
        %759 = vmatmul.mubr.bf16.gmra.mrb[0].mxu0 %v617
        %v760 = vpop.f32.mrb[0].mxu0
        %v761 = vadd.f32 %v550, %v760
        %v762 = vpop.f32.mrb[0].mxu0
        %v763 = vadd.f32 %v554, %v762
        %v764 = vpop.f32.mrb[0].mxu0
        %v765 = vadd.f32 %v550, %v764
        %v766 = vpop.f32.mrb[0].mxu0
        %v767 = vadd.f32 %v554, %v766
        %768 = vmatprep.mubr.bf16.mxu0 0
        %769 = vmatmul.mubr.bf16.gmra.mrb[0].mxu0 %v620
        %v770 = vpop.f32.mrb[0].mxu0
        %v771 = vadd.f32 %v550, %v770
        %v772 = vpop.f32.mrb[0].mxu0
        %v773 = vadd.f32 %v554, %v772
        %v774 = vpop.f32.mrb[0].mxu0
        %v775 = vpop.f32.mrb[0].mxu0
        %776 = vdwg.mxu0
        %v777 = vmax.f32 %v670, 0.0
        %v778 = vmax.f32 %v672, 0.0
        %v779 = vmax.f32 %v741, 0.0
        %v780 = vmax.f32 %v743, 0.0
        %v781 = vmax.f32 %v674, 0.0
        %v782 = vmax.f32 %v676, 0.0
        %v783 = vmax.f32 %v745, 0.0
        %v784 = vmax.f32 %v747, 0.0
        %v785 = vmax.f32 %v680, 0.0
        %v786 = vmax.f32 %v682, 0.0
        %v787 = vmax.f32 %v751, 0.0
        %v788 = vmax.f32 %v753, 0.0
        %v789 = vmax.f32 %v684, 0.0
        %v790 = vmax.f32 %v686, 0.0
        %v791 = vmax.f32 %v755, 0.0
        %v792 = vmax.f32 %v757, 0.0
        %v793 = vmax.f32 %v690, 0.0
        %v794 = vmax.f32 %v692, 0.0
        %v795 = vmax.f32 %v761, 0.0
        %v796 = vmax.f32 %v763, 0.0
        %v797 = vmax.f32 %v694, 0.0
        %v798 = vmax.f32 %v696, 0.0
        %v799 = vmax.f32 %v765, 0.0
        %v800 = vmax.f32 %v767, 0.0
        %v801 = vmax.f32 %v700, 0.0
        %v802 = vmax.f32 %v702, 0.0
        %v803 = vmax.f32 %v771, 0.0
        %v804 = vmax.f32 %v773, 0.0
        %v805 = vmax.f32 %v777, %v779
        %v806 = vmax.f32 %v778, %v780
        %v807 = vmax.f32 %v781, %v783
        %v808 = vmax.f32 %v782, %v784
        %v809 = vmax.f32 %v785, %v787
        %v810 = vmax.f32 %v786, %v788
        %v811 = vmax.f32 %v789, %v791
        %v812 = vmax.f32 %v790, %v792
        %v813 = vmax.f32 %v793, %v795
        %v814 = vmax.f32 %v794, %v796
        %v815 = vmax.f32 %v797, %v799
        %v816 = vmax.f32 %v798, %v800
        %v817 = vmax.f32 %v801, %v803
        %v818 = vmax.f32 %v802, %v804
        %v819 = vpack.c.bf16 %v807, %v805
        %v820 = vpack.c.bf16 %v808, %v806
        %v821 = vpack.c.bf16 %v811, %v809
        %v822 = vpack.c.bf16 %v812, %v810
        %v823 = vpack.c.bf16 %v815, %v813
        %v824 = vpack.c.bf16 %v816, %v814
        %v825 = vpack.c.bf16 %v817, %v817
        %v826 = vpack.c.bf16 %v818, %v818
        %v827 = vld [vmem:[#allocation5] sm:$0xff]
        %v828 = vld [vmem:[#allocation5 + $0x8] sm:$0xff]
        %v829 = vld [vmem:[#allocation5 + $0x10] sm:$0xff]
        %v830 = vld [vmem:[#allocation5 + $0x18] sm:$0xff]
        %v831 = vld [vmem:[#allocation5 + $0x20] sm:$0xff]
        %v832 = vld [vmem:[#allocation5 + $0x28] sm:$0xff]
        %v833 = vld [vmem:[#allocation5 + $0x30] sm:$0xff]
        %v834 = vld [vmem:[#allocation5 + $0x38] sm:$0xff]
        %v835 = vld [vmem:[#allocation5 + $0x40] sm:$0xff]
        %v836 = vld [vmem:[#allocation5 + $0x48] sm:$0xff]
        %v837 = vld [vmem:[#allocation5 + $0x50] sm:$0xff]
        %v838 = vld [vmem:[#allocation5 + $0x58] sm:$0xff]
        %v839 = vld [vmem:[#allocation5 + $0x60] sm:$0xff]
        %v840 = vld [vmem:[#allocation5 + $0x68] sm:$0xff]
        %v841 = vld [vmem:[#allocation5 + $0x70] sm:$0xff]
        %v842 = vld [vmem:[#allocation5 + $0x78] sm:$0xff]
        %v843 = vld [vmem:[#allocation5 + $0x80] sm:$0xff]
        %v844 = vld [vmem:[#allocation5 + $0x88] sm:$0xff]
        %v845 = vld [vmem:[#allocation5 + $0x90] sm:$0xff]
        %v846 = vld [vmem:[#allocation5 + $0x98] sm:$0xff]
        %v847 = vld [vmem:[#allocation5 + $0xa0] sm:$0xff]
        %v848 = vld [vmem:[#allocation5 + $0xa8] sm:$0xff]
        %v849 = vld [vmem:[#allocation5 + $0xb0] sm:$0xff]
        %v850 = vld [vmem:[#allocation5 + $0xb8] sm:$0xff]
        %v851 = vld [vmem:[#allocation5 + $0xc0] sm:$0xff]
        %v852 = vld [vmem:[#allocation5 + $0xc8] sm:$0xff]
        %v853 = vld [vmem:[#allocation5 + $0xd0] sm:$0xff]
        %v854 = vld [vmem:[#allocation5 + $0xd8] sm:$0xff]
        %v855 = vld [vmem:[#allocation5 + $0xe0] sm:$0xff]
        %v856 = vld [vmem:[#allocation5 + $0xe8] sm:$0xff]
        %v857 = vld [vmem:[#allocation5 + $0xf0] sm:$0xff]
        %v858 = vld [vmem:[#allocation5 + $0xf8] sm:$0xff]
        %v859 = vld [vmem:[#allocation5 + $0x100] sm:$0xff]
        %v860 = vld [vmem:[#allocation5 + $0x108] sm:$0xff]
        %v861 = vld [vmem:[#allocation5 + $0x110] sm:$0xff]
        %v862 = vld [vmem:[#allocation5 + $0x118] sm:$0xff]
        %v863 = vld [vmem:[#allocation5 + $0x120] sm:$0xff]
        %v864 = vld [vmem:[#allocation5 + $0x128] sm:$0xff]
        %v865 = vld [vmem:[#allocation5 + $0x130] sm:$0xff]
        %v866 = vld [vmem:[#allocation5 + $0x138] sm:$0xff]
        %v867 = vld [vmem:[#allocation5 + $0x140] sm:$0xff]
        %v868 = vld [vmem:[#allocation5 + $0x148] sm:$0xff]
        %v869 = vld [vmem:[#allocation5 + $0x150] sm:$0xff]
        %v870 = vld [vmem:[#allocation5 + $0x158] sm:$0xff]
        %v871 = vld [vmem:[#allocation5 + $0x160] sm:$0xff]
        %v872 = vld [vmem:[#allocation5 + $0x168] sm:$0xff]
        %v873 = vld [vmem:[#allocation5 + $0x170] sm:$0xff]
        %v874 = vld [vmem:[#allocation5 + $0x178] sm:$0xff]
        %v875 = vld [vmem:[#allocation5 + $0x180] sm:$0xff]
        %v876 = vld [vmem:[#allocation5 + $0x188] sm:$0xff]
        %v877 = vld [vmem:[#allocation5 + $0x190] sm:$0xff]
        %v878 = vld [vmem:[#allocation5 + $0x198] sm:$0xff]
        %v879 = vld [vmem:[#allocation5 + $0x1a0] sm:$0xff]
        %v880 = vld [vmem:[#allocation5 + $0x1a8] sm:$0xff]
        %v881 = vld [vmem:[#allocation5 + $0x1b0] sm:$0xff]
        %v882 = vld [vmem:[#allocation5 + $0x1b8] sm:$0xff]
        %v883 = vld [vmem:[#allocation5 + $0x1c0] sm:$0xff]
        %v884 = vld [vmem:[#allocation5 + $0x1c8] sm:$0xff]
        %v885 = vld [vmem:[#allocation5 + $0x1d0] sm:$0xff]
        %v886 = vld [vmem:[#allocation5 + $0x1d8] sm:$0xff]
        %v887 = vld [vmem:[#allocation5 + $0x1e0] sm:$0xff]
        %v888 = vld [vmem:[#allocation5 + $0x1e8] sm:$0xff]
        %v889 = vld [vmem:[#allocation5 + $0x1f0] sm:$0xff]
        %v890 = vld [vmem:[#allocation5 + $0x1f8] sm:$0xff]
        %v891 = vld [vmem:[%s4] sm:$0xf]
        %v893 = vlaneseq
        %v894 = vshrl.u32 %v893, 7
        %v895 = vsub.s32 0, %v894
        %v896 = vrot.slane %v891, %v895
        %v897 = vlaneseq
        %v898 = vshrl.u32 %v897, 7
        %v899 = vsub.s32 1, %v898
        %v900 = vrot.slane %v891, %v899
        %v901 = vlaneseq
        %v902 = vshrl.u32 %v901, 7
        %v903 = vsub.s32 2, %v902
        %v904 = vrot.slane %v891, %v903
        %v905 = vlaneseq
        %v906 = vshrl.u32 %v905, 7
        %v907 = vsub.s32 3, %v906
        %v908 = vrot.slane %v891, %v907
        %v977 = vunpack.c.l.b16 %v827
        %v978 = vunpack.c.h.b16 %v827
        %v979 = vunpack.c.l.b16 %v828
        %v980 = vunpack.c.h.b16 %v828
        %v981 = vunpack.c.l.b16 %v829
        %v982 = vunpack.c.h.b16 %v829
        %v983 = vunpack.c.l.b16 %v830
        %v984 = vunpack.c.h.b16 %v830
        %v985 = vunpack.c.l.b16 %v831
        %v986 = vunpack.c.h.b16 %v831
        %v987 = vunpack.c.l.b16 %v832
        %v988 = vunpack.c.h.b16 %v832
        %v989 = vunpack.c.l.b16 %v833
        %v990 = vunpack.c.h.b16 %v833
        %v991 = vunpack.c.l.b16 %v834
        %v992 = vunpack.c.h.b16 %v834
        %v993 = vunpack.c.l.b16 %v835
        %v994 = vunpack.c.h.b16 %v835
        %v995 = vunpack.c.l.b16 %v836
        %v996 = vunpack.c.h.b16 %v836
        %v997 = vunpack.c.l.b16 %v837
        %v998 = vunpack.c.h.b16 %v837
        %v999 = vunpack.c.l.b16 %v838
        %v1000 = vunpack.c.h.b16 %v838
        %v1001 = vunpack.c.l.b16 %v839
        %v1002 = vunpack.c.h.b16 %v839
        %v1003 = vunpack.c.l.b16 %v840
        %v1004 = vunpack.c.h.b16 %v840
        %v1005 = vunpack.c.l.b16 %v841
        %v1006 = vunpack.c.h.b16 %v841
        %v1007 = vunpack.c.l.b16 %v842
        %v1008 = vunpack.c.h.b16 %v842
        %v1009 = vunpack.c.l.b16 %v843
        %v1010 = vunpack.c.h.b16 %v843
        %v1011 = vunpack.c.l.b16 %v844
        %v1012 = vunpack.c.h.b16 %v844
        %v1013 = vunpack.c.l.b16 %v845
        %v1014 = vunpack.c.h.b16 %v845
        %v1015 = vunpack.c.l.b16 %v846
        %v1016 = vunpack.c.h.b16 %v846
        %v1017 = vunpack.c.l.b16 %v847
        %v1018 = vunpack.c.h.b16 %v847
        %v1019 = vunpack.c.l.b16 %v848
        %v1020 = vunpack.c.h.b16 %v848
        %v1021 = vunpack.c.l.b16 %v849
        %v1022 = vunpack.c.h.b16 %v849
        %v1023 = vunpack.c.l.b16 %v850
        %v1024 = vunpack.c.h.b16 %v850
        %v1025 = vunpack.c.l.b16 %v851
        %v1026 = vunpack.c.h.b16 %v851
        %v1027 = vunpack.c.l.b16 %v852
        %v1028 = vunpack.c.h.b16 %v852
        %v1029 = vunpack.c.l.b16 %v853
        %v1030 = vunpack.c.h.b16 %v853
        %v1031 = vunpack.c.l.b16 %v854
        %v1032 = vunpack.c.h.b16 %v854
        %v1033 = vunpack.c.l.b16 %v855
        %v1034 = vunpack.c.h.b16 %v855
        %v1035 = vunpack.c.l.b16 %v856
        %v1036 = vunpack.c.h.b16 %v856
        %v1037 = vunpack.c.l.b16 %v857
        %v1038 = vunpack.c.h.b16 %v857
        %v1039 = vunpack.c.l.b16 %v858
        %v1040 = vunpack.c.h.b16 %v858
        %v1041 = vunpack.c.l.b16 %v859
        %v1042 = vunpack.c.h.b16 %v859
        %v1043 = vunpack.c.l.b16 %v860
        %v1044 = vunpack.c.h.b16 %v860
        %v1045 = vunpack.c.l.b16 %v861
        %v1046 = vunpack.c.h.b16 %v861
        %v1047 = vunpack.c.l.b16 %v862
        %v1048 = vunpack.c.h.b16 %v862
        %v1049 = vunpack.c.l.b16 %v863
        %v1050 = vunpack.c.h.b16 %v863
        %v1051 = vunpack.c.l.b16 %v864
        %v1052 = vunpack.c.h.b16 %v864
        %v1053 = vunpack.c.l.b16 %v865
        %v1054 = vunpack.c.h.b16 %v865
        %v1055 = vunpack.c.l.b16 %v866
        %v1056 = vunpack.c.h.b16 %v866
        %v1057 = vunpack.c.l.b16 %v867
        %v1058 = vunpack.c.h.b16 %v867
        %v1059 = vunpack.c.l.b16 %v868
        %v1060 = vunpack.c.h.b16 %v868
        %v1061 = vunpack.c.l.b16 %v869
        %v1062 = vunpack.c.h.b16 %v869
        %v1063 = vunpack.c.l.b16 %v870
        %v1064 = vunpack.c.h.b16 %v870
        %v1065 = vunpack.c.l.b16 %v871
        %v1066 = vunpack.c.h.b16 %v871
        %v1067 = vunpack.c.l.b16 %v872
        %v1068 = vunpack.c.h.b16 %v872
        %v1069 = vunpack.c.l.b16 %v873
        %v1070 = vunpack.c.h.b16 %v873
        %v1071 = vunpack.c.l.b16 %v874
        %v1072 = vunpack.c.h.b16 %v874
        %v1073 = vunpack.c.l.b16 %v875
        %v1074 = vunpack.c.h.b16 %v875
        %v1075 = vunpack.c.l.b16 %v876
        %v1076 = vunpack.c.h.b16 %v876
        %v1077 = vunpack.c.l.b16 %v877
        %v1078 = vunpack.c.h.b16 %v877
        %v1079 = vunpack.c.l.b16 %v878
        %v1080 = vunpack.c.h.b16 %v878
        %v1081 = vunpack.c.l.b16 %v879
        %v1082 = vunpack.c.h.b16 %v879
        %v1083 = vunpack.c.l.b16 %v880
        %v1084 = vunpack.c.h.b16 %v880
        %v1085 = vunpack.c.l.b16 %v881
        %v1086 = vunpack.c.h.b16 %v881
        %v1087 = vunpack.c.l.b16 %v882
        %v1088 = vunpack.c.h.b16 %v882
        %v1089 = vunpack.c.l.b16 %v883
        %v1090 = vunpack.c.h.b16 %v883
        %v1091 = vunpack.c.l.b16 %v884
        %v1092 = vunpack.c.h.b16 %v884
        %v1093 = vunpack.c.l.b16 %v885
        %v1094 = vunpack.c.h.b16 %v885
        %v1095 = vunpack.c.l.b16 %v886
        %v1096 = vunpack.c.h.b16 %v886
        %v1097 = vunpack.c.l.b16 %v887
        %v1098 = vunpack.c.h.b16 %v887
        %v1099 = vunpack.c.l.b16 %v888
        %v1100 = vunpack.c.h.b16 %v888
        %v1101 = vunpack.c.l.b16 %v889
        %v1102 = vunpack.c.h.b16 %v889
        %v1103 = vunpack.c.l.b16 %v890
        %v1104 = vunpack.c.h.b16 %v890
        %v1105 = vpack.c.b16 %v981, %v977
        %v1106 = vpack.c.b16 %v982, %v978
        %v1107 = vpack.c.b16 %v983, %v979
        %v1108 = vpack.c.b16 %v984, %v980
        %v1109 = vpack.c.b16 %v989, %v985
        %v1110 = vpack.c.b16 %v990, %v986
        %v1111 = vpack.c.b16 %v991, %v987
        %v1112 = vpack.c.b16 %v992, %v988
        %v1113 = vpack.c.b16 %v997, %v993
        %v1114 = vpack.c.b16 %v998, %v994
        %v1115 = vpack.c.b16 %v999, %v995
        %v1116 = vpack.c.b16 %v1000, %v996
        %v1117 = vpack.c.b16 %v1005, %v1001
        %v1118 = vpack.c.b16 %v1006, %v1002
        %v1119 = vpack.c.b16 %v1007, %v1003
        %v1120 = vpack.c.b16 %v1008, %v1004
        %v1121 = vpack.c.b16 %v1013, %v1009
        %v1122 = vpack.c.b16 %v1014, %v1010
        %v1123 = vpack.c.b16 %v1015, %v1011
        %v1124 = vpack.c.b16 %v1016, %v1012
        %v1125 = vpack.c.b16 %v1021, %v1017
        %v1126 = vpack.c.b16 %v1022, %v1018
        %v1127 = vpack.c.b16 %v1023, %v1019
        %v1128 = vpack.c.b16 %v1024, %v1020
        %v1129 = vpack.c.b16 %v1029, %v1025
        %v1130 = vpack.c.b16 %v1030, %v1026
        %v1131 = vpack.c.b16 %v1031, %v1027
        %v1132 = vpack.c.b16 %v1032, %v1028
        %v1133 = vpack.c.b16 %v1037, %v1033
        %v1134 = vpack.c.b16 %v1038, %v1034
        %v1135 = vpack.c.b16 %v1039, %v1035
        %v1136 = vpack.c.b16 %v1040, %v1036
        %v1137 = vpack.c.b16 %v1045, %v1041
        %v1138 = vpack.c.b16 %v1046, %v1042
        %v1139 = vpack.c.b16 %v1047, %v1043
        %v1140 = vpack.c.b16 %v1048, %v1044
        %v1141 = vpack.c.b16 %v1053, %v1049
        %v1142 = vpack.c.b16 %v1054, %v1050
        %v1143 = vpack.c.b16 %v1055, %v1051
        %v1144 = vpack.c.b16 %v1056, %v1052
        %v1145 = vpack.c.b16 %v1061, %v1057
        %v1146 = vpack.c.b16 %v1062, %v1058
        %v1147 = vpack.c.b16 %v1063, %v1059
        %v1148 = vpack.c.b16 %v1064, %v1060
        %v1149 = vpack.c.b16 %v1069, %v1065
        %v1150 = vpack.c.b16 %v1070, %v1066
        %v1151 = vpack.c.b16 %v1071, %v1067
        %v1152 = vpack.c.b16 %v1072, %v1068
        %v1153 = vpack.c.b16 %v1077, %v1073
        %v1154 = vpack.c.b16 %v1078, %v1074
        %v1155 = vpack.c.b16 %v1079, %v1075
        %v1156 = vpack.c.b16 %v1080, %v1076
        %v1157 = vpack.c.b16 %v1085, %v1081
        %v1158 = vpack.c.b16 %v1086, %v1082
        %v1159 = vpack.c.b16 %v1087, %v1083
        %v1160 = vpack.c.b16 %v1088, %v1084
        %v1161 = vpack.c.b16 %v1093, %v1089
        %v1162 = vpack.c.b16 %v1094, %v1090
        %v1163 = vpack.c.b16 %v1095, %v1091
        %v1164 = vpack.c.b16 %v1096, %v1092
        %v1165 = vpack.c.b16 %v1101, %v1097
        %v1166 = vpack.c.b16 %v1102, %v1098
        %v1167 = vpack.c.b16 %v1103, %v1099
        %v1168 = vpack.c.b16 %v1104, %v1100
        %1233 = vmatprep.subr.bf16.mxu0 %v1106
        %1234 = vmatpush1.bf16.msra.mxu0 %v1105
        %1235 = vmatprep.subr.bf16.mxu0 %v1110
        %1236 = vmatpush1.bf16.msra.mxu0 %v1109
        %1237 = vmatprep.subr.bf16.mxu0 %v1114
        %1238 = vmatpush1.bf16.msra.mxu0 %v1113
        %1239 = vmatprep.subr.bf16.mxu0 %v1118
        %1240 = vmatpush1.bf16.msra.mxu0 %v1117
        %1241 = vmatprep.subr.bf16.mxu0 %v1122
        %1242 = vmatpush1.bf16.msra.mxu0 %v1121
        %1243 = vmatprep.subr.bf16.mxu0 %v1126
        %1244 = vmatpush1.bf16.msra.mxu0 %v1125
        %1245 = vmatprep.subr.bf16.mxu0 %v1130
        %1246 = vmatpush1.bf16.msra.mxu0 %v1129
        %1247 = vmatprep.subr.bf16.mxu0 %v1134
        %1248 = vmatpush1.bf16.msra.mxu0 %v1133
        %1249 = vmatprep.subr.bf16.mxu0 %v1138
        %1250 = vmatpush1.bf16.msra.mxu0 %v1137
        %1251 = vmatprep.subr.bf16.mxu0 %v1142
        %1252 = vmatpush1.bf16.msra.mxu0 %v1141
        %1253 = vmatprep.subr.bf16.mxu0 %v1146
        %1254 = vmatpush1.bf16.msra.mxu0 %v1145
        %1255 = vmatprep.subr.bf16.mxu0 %v1150
        %1256 = vmatpush1.bf16.msra.mxu0 %v1149
        %1257 = vmatprep.subr.bf16.mxu0 %v1154
        %1258 = vmatpush1.bf16.msra.mxu0 %v1153
        %1259 = vmatprep.subr.bf16.mxu0 %v1158
        %1260 = vmatpush1.bf16.msra.mxu0 %v1157
        %1261 = vmatprep.subr.bf16.mxu0 %v1162
        %1262 = vmatpush1.bf16.msra.mxu0 %v1161
        %1263 = vmatprep.subr.bf16.mxu0 %v1166
        %1264 = vmatpush1.bf16.msra.mxu0 %v1165
        %1265 = vmatprep.mubr.bf16.mxu0 %v820
        %1266 = vmatmul.mubr.bf16.gmra.mrb[0].mxu0 %v819
        %v1267 = vpop.f32.mrb[0].mxu0
        %v1268 = vadd.f32 %v896, %v1267
        %v1269 = vpop.f32.mrb[0].mxu0
        %v1270 = vadd.f32 %v900, %v1269
        %v1271 = vpop.f32.mrb[0].mxu0
        %v1272 = vadd.f32 %v896, %v1271
        %v1273 = vpop.f32.mrb[0].mxu0
        %v1274 = vadd.f32 %v900, %v1273
        %1275 = vmatprep.mubr.bf16.mxu0 %v822
        %1276 = vmatmul.mubr.bf16.gmra.mrb[0].mxu0 %v821
        %v1277 = vpop.f32.mrb[0].mxu0
        %v1278 = vadd.f32 %v896, %v1277
        %v1279 = vpop.f32.mrb[0].mxu0
        %v1280 = vadd.f32 %v900, %v1279
        %v1281 = vpop.f32.mrb[0].mxu0
        %v1282 = vadd.f32 %v896, %v1281
        %v1283 = vpop.f32.mrb[0].mxu0
        %v1284 = vadd.f32 %v900, %v1283
        %1285 = vmatprep.mubr.bf16.mxu0 %v824
        %1286 = vmatmul.mubr.bf16.gmra.mrb[0].mxu0 %v823
        %v1287 = vpop.f32.mrb[0].mxu0
        %v1288 = vadd.f32 %v896, %v1287
        %v1289 = vpop.f32.mrb[0].mxu0
        %v1290 = vadd.f32 %v900, %v1289
        %v1291 = vpop.f32.mrb[0].mxu0
        %v1292 = vadd.f32 %v896, %v1291
        %v1293 = vpop.f32.mrb[0].mxu0
        %v1294 = vadd.f32 %v900, %v1293
        %1295 = vmatprep.mubr.bf16.mxu0 %v826
        %1296 = vmatmul.mubr.bf16.gmra.mrb[0].mxu0 %v825
        %v1297 = vpop.f32.mrb[0].mxu0
        %v1298 = vadd.f32 %v896, %v1297
        %v1299 = vpop.f32.mrb[0].mxu0
        %v1300 = vadd.f32 %v900, %v1299
        %v1301 = vpop.f32.mrb[0].mxu0
        %v1302 = vpop.f32.mrb[0].mxu0
        %1303 = vdwg.mxu0
        %1304 = vmatprep.subr.bf16.mxu0 %v1108
        %1305 = vmatpush1.bf16.msra.mxu0 %v1107
        %1306 = vmatprep.subr.bf16.mxu0 %v1112
        %1307 = vmatpush1.bf16.msra.mxu0 %v1111
        %1308 = vmatprep.subr.bf16.mxu0 %v1116
        %1309 = vmatpush1.bf16.msra.mxu0 %v1115
        %1310 = vmatprep.subr.bf16.mxu0 %v1120
        %1311 = vmatpush1.bf16.msra.mxu0 %v1119
        %1312 = vmatprep.subr.bf16.mxu0 %v1124
        %1313 = vmatpush1.bf16.msra.mxu0 %v1123
        %1314 = vmatprep.subr.bf16.mxu0 %v1128
        %1315 = vmatpush1.bf16.msra.mxu0 %v1127
        %1316 = vmatprep.subr.bf16.mxu0 %v1132
        %1317 = vmatpush1.bf16.msra.mxu0 %v1131
        %1318 = vmatprep.subr.bf16.mxu0 %v1136
        %1319 = vmatpush1.bf16.msra.mxu0 %v1135
        %1320 = vmatprep.subr.bf16.mxu0 %v1140
        %1321 = vmatpush1.bf16.msra.mxu0 %v1139
        %1322 = vmatprep.subr.bf16.mxu0 %v1144
        %1323 = vmatpush1.bf16.msra.mxu0 %v1143
        %1324 = vmatprep.subr.bf16.mxu0 %v1148
        %1325 = vmatpush1.bf16.msra.mxu0 %v1147
        %1326 = vmatprep.subr.bf16.mxu0 %v1152
        %1327 = vmatpush1.bf16.msra.mxu0 %v1151
        %1328 = vmatprep.subr.bf16.mxu0 %v1156
        %1329 = vmatpush1.bf16.msra.mxu0 %v1155
        %1330 = vmatprep.subr.bf16.mxu0 %v1160
        %1331 = vmatpush1.bf16.msra.mxu0 %v1159
        %1332 = vmatprep.subr.bf16.mxu0 %v1164
        %1333 = vmatpush1.bf16.msra.mxu0 %v1163
        %1334 = vmatprep.subr.bf16.mxu0 %v1168
        %1335 = vmatpush1.bf16.msra.mxu0 %v1167
        %1336 = vmatprep.mubr.bf16.mxu0 %v820
        %1337 = vmatmul.mubr.bf16.gmra.mrb[0].mxu0 %v819
        %v1338 = vpop.f32.mrb[0].mxu0
        %v1339 = vadd.f32 %v904, %v1338
        %v1340 = vpop.f32.mrb[0].mxu0
        %v1341 = vadd.f32 %v908, %v1340
        %v1342 = vpop.f32.mrb[0].mxu0
        %v1343 = vadd.f32 %v904, %v1342
        %v1344 = vpop.f32.mrb[0].mxu0
        %v1345 = vadd.f32 %v908, %v1344
        %1346 = vmatprep.mubr.bf16.mxu0 %v822
        %1347 = vmatmul.mubr.bf16.gmra.mrb[0].mxu0 %v821
        %v1348 = vpop.f32.mrb[0].mxu0
        %v1349 = vadd.f32 %v904, %v1348
        %v1350 = vpop.f32.mrb[0].mxu0
        %v1351 = vadd.f32 %v908, %v1350
        %v1352 = vpop.f32.mrb[0].mxu0
        %v1353 = vadd.f32 %v904, %v1352
        %v1354 = vpop.f32.mrb[0].mxu0
        %v1355 = vadd.f32 %v908, %v1354
        %1356 = vmatprep.mubr.bf16.mxu0 %v824
        %1357 = vmatmul.mubr.bf16.gmra.mrb[0].mxu0 %v823
        %v1358 = vpop.f32.mrb[0].mxu0
        %v1359 = vadd.f32 %v904, %v1358
        %v1360 = vpop.f32.mrb[0].mxu0
        %v1361 = vadd.f32 %v908, %v1360
        %v1362 = vpop.f32.mrb[0].mxu0
        %v1363 = vadd.f32 %v904, %v1362
        %v1364 = vpop.f32.mrb[0].mxu0
        %v1365 = vadd.f32 %v908, %v1364
        %1366 = vmatprep.mubr.bf16.mxu0 %v826
        %1367 = vmatmul.mubr.bf16.gmra.mrb[0].mxu0 %v825
        %v1368 = vpop.f32.mrb[0].mxu0
        %v1369 = vadd.f32 %v904, %v1368
        %v1370 = vpop.f32.mrb[0].mxu0
        %v1371 = vadd.f32 %v908, %v1370
        %v1372 = vpop.f32.mrb[0].mxu0
        %v1373 = vpop.f32.mrb[0].mxu0
        %1374 = vdwg.mxu0
        %v1375 = vmax.f32 %v1268, 0.0
        %v1376 = vmax.f32 %v1270, 0.0
        %v1377 = vmax.f32 %v1339, 0.0
        %v1378 = vmax.f32 %v1341, 0.0
        %v1379 = vmax.f32 %v1272, 0.0
        %v1380 = vmax.f32 %v1274, 0.0
        %v1381 = vmax.f32 %v1343, 0.0
        %v1382 = vmax.f32 %v1345, 0.0
        %v1383 = vmax.f32 %v1278, 0.0
        %v1384 = vmax.f32 %v1280, 0.0
        %v1385 = vmax.f32 %v1349, 0.0
        %v1386 = vmax.f32 %v1351, 0.0
        %v1387 = vmax.f32 %v1282, 0.0
        %v1388 = vmax.f32 %v1284, 0.0
        %v1389 = vmax.f32 %v1353, 0.0
        %v1390 = vmax.f32 %v1355, 0.0
        %v1391 = vmax.f32 %v1288, 0.0
        %v1392 = vmax.f32 %v1290, 0.0
        %v1393 = vmax.f32 %v1359, 0.0
        %v1394 = vmax.f32 %v1361, 0.0
        %v1395 = vmax.f32 %v1292, 0.0
        %v1396 = vmax.f32 %v1294, 0.0
        %v1397 = vmax.f32 %v1363, 0.0
        %v1398 = vmax.f32 %v1365, 0.0
        %v1399 = vmax.f32 %v1298, 0.0
        %v1400 = vmax.f32 %v1300, 0.0
        %v1401 = vmax.f32 %v1369, 0.0
        %v1402 = vmax.f32 %v1371, 0.0
        %v1403 = vmax.f32 %v1375, %v1377
        %v1404 = vmax.f32 %v1376, %v1378
        %v1405 = vmax.f32 %v1379, %v1381
        %v1406 = vmax.f32 %v1380, %v1382
        %v1407 = vmax.f32 %v1383, %v1385
        %v1408 = vmax.f32 %v1384, %v1386
        %v1409 = vmax.f32 %v1387, %v1389
        %v1410 = vmax.f32 %v1388, %v1390
        %v1411 = vmax.f32 %v1391, %v1393
        %v1412 = vmax.f32 %v1392, %v1394
        %v1413 = vmax.f32 %v1395, %v1397
        %v1414 = vmax.f32 %v1396, %v1398
        %v1415 = vmax.f32 %v1399, %v1401
        %v1416 = vmax.f32 %v1400, %v1402
        %v1417 = vpack.c.bf16 %v1405, %v1403
        %v1418 = vpack.c.bf16 %v1406, %v1404
        %v1419 = vpack.c.bf16 %v1409, %v1407
        %v1420 = vpack.c.bf16 %v1410, %v1408
        %v1421 = vpack.c.bf16 %v1413, %v1411
        %v1422 = vpack.c.bf16 %v1414, %v1412
        %v1423 = vpack.c.bf16 %v1415, %v1415
        %v1424 = vpack.c.bf16 %v1416, %v1416
        %v1425 = vld [vmem:[#allocation7] sm:$0xff]
        %v1426 = vld [vmem:[#allocation7 + $0x8] sm:$0xff]
        %v1427 = vld [vmem:[#allocation7 + $0x10] sm:$0xff]
        %v1428 = vld [vmem:[#allocation7 + $0x18] sm:$0xff]
        %v1429 = vld [vmem:[#allocation7 + $0x20] sm:$0xff]
        %v1430 = vld [vmem:[#allocation7 + $0x28] sm:$0xff]
        %v1431 = vld [vmem:[#allocation7 + $0x30] sm:$0xff]
        %v1432 = vld [vmem:[#allocation7 + $0x38] sm:$0xff]
        %v1433 = vld [vmem:[#allocation7 + $0x40] sm:$0xff]
        %v1434 = vld [vmem:[#allocation7 + $0x48] sm:$0xff]
        %v1435 = vld [vmem:[#allocation7 + $0x50] sm:$0xff]
        %v1436 = vld [vmem:[#allocation7 + $0x58] sm:$0xff]
        %v1437 = vld [vmem:[#allocation7 + $0x60] sm:$0xff]
        %v1438 = vld [vmem:[#allocation7 + $0x68] sm:$0xff]
        %v1439 = vld [vmem:[#allocation7 + $0x70] sm:$0xff]
        %v1440 = vld [vmem:[#allocation7 + $0x78] sm:$0xff]
        %v1441 = vld [vmem:[#allocation7 + $0x80] sm:$0xff]
        %v1442 = vld [vmem:[#allocation7 + $0x88] sm:$0xff]
        %v1443 = vld [vmem:[#allocation7 + $0x90] sm:$0xff]
        %v1444 = vld [vmem:[#allocation7 + $0x98] sm:$0xff]
        %v1445 = vld [vmem:[#allocation7 + $0xa0] sm:$0xff]
        %v1446 = vld [vmem:[#allocation7 + $0xa8] sm:$0xff]
        %v1447 = vld [vmem:[#allocation7 + $0xb0] sm:$0xff]
        %v1448 = vld [vmem:[#allocation7 + $0xb8] sm:$0xff]
        %v1449 = vld [vmem:[#allocation7 + $0xc0] sm:$0xff]
        %v1450 = vld [vmem:[#allocation7 + $0xc8] sm:$0xff]
        %v1451 = vld [vmem:[#allocation7 + $0xd0] sm:$0xff]
        %v1452 = vld [vmem:[#allocation7 + $0xd8] sm:$0xff]
        %v1453 = vld [vmem:[#allocation7 + $0xe0] sm:$0xff]
        %v1454 = vld [vmem:[#allocation7 + $0xe8] sm:$0xff]
        %v1455 = vld [vmem:[#allocation7 + $0xf0] sm:$0xff]
        %v1456 = vld [vmem:[#allocation7 + $0xf8] sm:$0xff]
        %v1457 = vld [vmem:[#allocation7 + $0x100] sm:$0xff]
        %v1458 = vld [vmem:[#allocation7 + $0x108] sm:$0xff]
        %v1459 = vld [vmem:[#allocation7 + $0x110] sm:$0xff]
        %v1460 = vld [vmem:[#allocation7 + $0x118] sm:$0xff]
        %v1461 = vld [vmem:[#allocation7 + $0x120] sm:$0xff]
        %v1462 = vld [vmem:[#allocation7 + $0x128] sm:$0xff]
        %v1463 = vld [vmem:[#allocation7 + $0x130] sm:$0xff]
        %v1464 = vld [vmem:[#allocation7 + $0x138] sm:$0xff]
        %v1465 = vld [vmem:[#allocation7 + $0x140] sm:$0xff]
        %v1466 = vld [vmem:[#allocation7 + $0x148] sm:$0xff]
        %v1467 = vld [vmem:[#allocation7 + $0x150] sm:$0xff]
        %v1468 = vld [vmem:[#allocation7 + $0x158] sm:$0xff]
        %v1469 = vld [vmem:[#allocation7 + $0x160] sm:$0xff]
        %v1470 = vld [vmem:[#allocation7 + $0x168] sm:$0xff]
        %v1471 = vld [vmem:[#allocation7 + $0x170] sm:$0xff]
        %v1472 = vld [vmem:[#allocation7 + $0x178] sm:$0xff]
        %v1473 = vld [vmem:[#allocation7 + $0x180] sm:$0xff]
        %v1474 = vld [vmem:[#allocation7 + $0x188] sm:$0xff]
        %v1475 = vld [vmem:[#allocation7 + $0x190] sm:$0xff]
        %v1476 = vld [vmem:[#allocation7 + $0x198] sm:$0xff]
        %v1477 = vld [vmem:[#allocation7 + $0x1a0] sm:$0xff]
        %v1478 = vld [vmem:[#allocation7 + $0x1a8] sm:$0xff]
        %v1479 = vld [vmem:[#allocation7 + $0x1b0] sm:$0xff]
        %v1480 = vld [vmem:[#allocation7 + $0x1b8] sm:$0xff]
        %v1481 = vld [vmem:[#allocation7 + $0x1c0] sm:$0xff]
        %v1482 = vld [vmem:[#allocation7 + $0x1c8] sm:$0xff]
        %v1483 = vld [vmem:[#allocation7 + $0x1d0] sm:$0xff]
        %v1484 = vld [vmem:[#allocation7 + $0x1d8] sm:$0xff]
        %v1485 = vld [vmem:[#allocation7 + $0x1e0] sm:$0xff]
        %v1486 = vld [vmem:[#allocation7 + $0x1e8] sm:$0xff]
        %v1487 = vld [vmem:[#allocation7 + $0x1f0] sm:$0xff]
        %v1488 = vld [vmem:[#allocation7 + $0x1f8] sm:$0xff]
        %v1489 = vld [vmem:[%s6] sm:$0xf]
        %v1491 = vlaneseq
        %v1492 = vshrl.u32 %v1491, 7
        %v1493 = vsub.s32 0, %v1492
        %v1494 = vrot.slane %v1489, %v1493
        %v1495 = vlaneseq
        %v1496 = vshrl.u32 %v1495, 7
        %v1497 = vsub.s32 1, %v1496
        %v1498 = vrot.slane %v1489, %v1497
        %v1499 = vlaneseq
        %v1500 = vshrl.u32 %v1499, 7
        %v1501 = vsub.s32 2, %v1500
        %v1502 = vrot.slane %v1489, %v1501
        %v1503 = vlaneseq
        %v1504 = vshrl.u32 %v1503, 7
        %v1505 = vsub.s32 3, %v1504
        %v1506 = vrot.slane %v1489, %v1505
        %v1575 = vunpack.c.l.b16 %v1425
        %v1576 = vunpack.c.h.b16 %v1425
        %v1577 = vunpack.c.l.b16 %v1426
        %v1578 = vunpack.c.h.b16 %v1426
        %v1579 = vunpack.c.l.b16 %v1427
        %v1580 = vunpack.c.h.b16 %v1427
        %v1581 = vunpack.c.l.b16 %v1428
        %v1582 = vunpack.c.h.b16 %v1428
        %v1583 = vunpack.c.l.b16 %v1429
        %v1584 = vunpack.c.h.b16 %v1429
        %v1585 = vunpack.c.l.b16 %v1430
        %v1586 = vunpack.c.h.b16 %v1430
        %v1587 = vunpack.c.l.b16 %v1431
        %v1588 = vunpack.c.h.b16 %v1431
        %v1589 = vunpack.c.l.b16 %v1432
        %v1590 = vunpack.c.h.b16 %v1432
        %v1591 = vunpack.c.l.b16 %v1433
        %v1592 = vunpack.c.h.b16 %v1433
        %v1593 = vunpack.c.l.b16 %v1434
        %v1594 = vunpack.c.h.b16 %v1434
        %v1595 = vunpack.c.l.b16 %v1435
        %v1596 = vunpack.c.h.b16 %v1435
        %v1597 = vunpack.c.l.b16 %v1436
        %v1598 = vunpack.c.h.b16 %v1436
        %v1599 = vunpack.c.l.b16 %v1437
        %v1600 = vunpack.c.h.b16 %v1437
        %v1601 = vunpack.c.l.b16 %v1438
        %v1602 = vunpack.c.h.b16 %v1438
        %v1603 = vunpack.c.l.b16 %v1439
        %v1604 = vunpack.c.h.b16 %v1439
        %v1605 = vunpack.c.l.b16 %v1440
        %v1606 = vunpack.c.h.b16 %v1440
        %v1607 = vunpack.c.l.b16 %v1441
        %v1608 = vunpack.c.h.b16 %v1441
        %v1609 = vunpack.c.l.b16 %v1442
        %v1610 = vunpack.c.h.b16 %v1442
        %v1611 = vunpack.c.l.b16 %v1443
        %v1612 = vunpack.c.h.b16 %v1443
        %v1613 = vunpack.c.l.b16 %v1444
        %v1614 = vunpack.c.h.b16 %v1444
        %v1615 = vunpack.c.l.b16 %v1445
        %v1616 = vunpack.c.h.b16 %v1445
        %v1617 = vunpack.c.l.b16 %v1446
        %v1618 = vunpack.c.h.b16 %v1446
        %v1619 = vunpack.c.l.b16 %v1447
        %v1620 = vunpack.c.h.b16 %v1447
        %v1621 = vunpack.c.l.b16 %v1448
        %v1622 = vunpack.c.h.b16 %v1448
        %v1623 = vunpack.c.l.b16 %v1449
        %v1624 = vunpack.c.h.b16 %v1449
        %v1625 = vunpack.c.l.b16 %v1450
        %v1626 = vunpack.c.h.b16 %v1450
        %v1627 = vunpack.c.l.b16 %v1451
        %v1628 = vunpack.c.h.b16 %v1451
        %v1629 = vunpack.c.l.b16 %v1452
        %v1630 = vunpack.c.h.b16 %v1452
        %v1631 = vunpack.c.l.b16 %v1453
        %v1632 = vunpack.c.h.b16 %v1453
        %v1633 = vunpack.c.l.b16 %v1454
        %v1634 = vunpack.c.h.b16 %v1454
        %v1635 = vunpack.c.l.b16 %v1455
        %v1636 = vunpack.c.h.b16 %v1455
        %v1637 = vunpack.c.l.b16 %v1456
        %v1638 = vunpack.c.h.b16 %v1456
        %v1639 = vunpack.c.l.b16 %v1457
        %v1640 = vunpack.c.h.b16 %v1457
        %v1641 = vunpack.c.l.b16 %v1458
        %v1642 = vunpack.c.h.b16 %v1458
        %v1643 = vunpack.c.l.b16 %v1459
        %v1644 = vunpack.c.h.b16 %v1459
        %v1645 = vunpack.c.l.b16 %v1460
        %v1646 = vunpack.c.h.b16 %v1460
        %v1647 = vunpack.c.l.b16 %v1461
        %v1648 = vunpack.c.h.b16 %v1461
        %v1649 = vunpack.c.l.b16 %v1462
        %v1650 = vunpack.c.h.b16 %v1462
        %v1651 = vunpack.c.l.b16 %v1463
        %v1652 = vunpack.c.h.b16 %v1463
        %v1653 = vunpack.c.l.b16 %v1464
        %v1654 = vunpack.c.h.b16 %v1464
        %v1655 = vunpack.c.l.b16 %v1465
        %v1656 = vunpack.c.h.b16 %v1465
        %v1657 = vunpack.c.l.b16 %v1466
        %v1658 = vunpack.c.h.b16 %v1466
        %v1659 = vunpack.c.l.b16 %v1467
        %v1660 = vunpack.c.h.b16 %v1467
        %v1661 = vunpack.c.l.b16 %v1468
        %v1662 = vunpack.c.h.b16 %v1468
        %v1663 = vunpack.c.l.b16 %v1469
        %v1664 = vunpack.c.h.b16 %v1469
        %v1665 = vunpack.c.l.b16 %v1470
        %v1666 = vunpack.c.h.b16 %v1470
        %v1667 = vunpack.c.l.b16 %v1471
        %v1668 = vunpack.c.h.b16 %v1471
        %v1669 = vunpack.c.l.b16 %v1472
        %v1670 = vunpack.c.h.b16 %v1472
        %v1671 = vunpack.c.l.b16 %v1473
        %v1672 = vunpack.c.h.b16 %v1473
        %v1673 = vunpack.c.l.b16 %v1474
        %v1674 = vunpack.c.h.b16 %v1474
        %v1675 = vunpack.c.l.b16 %v1475
        %v1676 = vunpack.c.h.b16 %v1475
        %v1677 = vunpack.c.l.b16 %v1476
        %v1678 = vunpack.c.h.b16 %v1476
        %v1679 = vunpack.c.l.b16 %v1477
        %v1680 = vunpack.c.h.b16 %v1477
        %v1681 = vunpack.c.l.b16 %v1478
        %v1682 = vunpack.c.h.b16 %v1478
        %v1683 = vunpack.c.l.b16 %v1479
        %v1684 = vunpack.c.h.b16 %v1479
        %v1685 = vunpack.c.l.b16 %v1480
        %v1686 = vunpack.c.h.b16 %v1480
        %v1687 = vunpack.c.l.b16 %v1481
        %v1688 = vunpack.c.h.b16 %v1481
        %v1689 = vunpack.c.l.b16 %v1482
        %v1690 = vunpack.c.h.b16 %v1482
        %v1691 = vunpack.c.l.b16 %v1483
        %v1692 = vunpack.c.h.b16 %v1483
        %v1693 = vunpack.c.l.b16 %v1484
        %v1694 = vunpack.c.h.b16 %v1484
        %v1695 = vunpack.c.l.b16 %v1485
        %v1696 = vunpack.c.h.b16 %v1485
        %v1697 = vunpack.c.l.b16 %v1486
        %v1698 = vunpack.c.h.b16 %v1486
        %v1699 = vunpack.c.l.b16 %v1487
        %v1700 = vunpack.c.h.b16 %v1487
        %v1701 = vunpack.c.l.b16 %v1488
        %v1702 = vunpack.c.h.b16 %v1488
        %v1703 = vpack.c.b16 %v1579, %v1575
        %v1704 = vpack.c.b16 %v1580, %v1576
        %v1705 = vpack.c.b16 %v1581, %v1577
        %v1706 = vpack.c.b16 %v1582, %v1578
        %v1707 = vpack.c.b16 %v1587, %v1583
        %v1708 = vpack.c.b16 %v1588, %v1584
        %v1709 = vpack.c.b16 %v1589, %v1585
        %v1710 = vpack.c.b16 %v1590, %v1586
        %v1711 = vpack.c.b16 %v1595, %v1591
        %v1712 = vpack.c.b16 %v1596, %v1592
        %v1713 = vpack.c.b16 %v1597, %v1593
        %v1714 = vpack.c.b16 %v1598, %v1594
        %v1715 = vpack.c.b16 %v1603, %v1599
        %v1716 = vpack.c.b16 %v1604, %v1600
        %v1717 = vpack.c.b16 %v1605, %v1601
        %v1718 = vpack.c.b16 %v1606, %v1602
        %v1719 = vpack.c.b16 %v1611, %v1607
        %v1720 = vpack.c.b16 %v1612, %v1608
        %v1721 = vpack.c.b16 %v1613, %v1609
        %v1722 = vpack.c.b16 %v1614, %v1610
        %v1723 = vpack.c.b16 %v1619, %v1615
        %v1724 = vpack.c.b16 %v1620, %v1616
        %v1725 = vpack.c.b16 %v1621, %v1617
        %v1726 = vpack.c.b16 %v1622, %v1618
        %v1727 = vpack.c.b16 %v1627, %v1623
        %v1728 = vpack.c.b16 %v1628, %v1624
        %v1729 = vpack.c.b16 %v1629, %v1625
        %v1730 = vpack.c.b16 %v1630, %v1626
        %v1731 = vpack.c.b16 %v1635, %v1631
        %v1732 = vpack.c.b16 %v1636, %v1632
        %v1733 = vpack.c.b16 %v1637, %v1633
        %v1734 = vpack.c.b16 %v1638, %v1634
        %v1735 = vpack.c.b16 %v1643, %v1639
        %v1736 = vpack.c.b16 %v1644, %v1640
        %v1737 = vpack.c.b16 %v1645, %v1641
        %v1738 = vpack.c.b16 %v1646, %v1642
        %v1739 = vpack.c.b16 %v1651, %v1647
        %v1740 = vpack.c.b16 %v1652, %v1648
        %v1741 = vpack.c.b16 %v1653, %v1649
        %v1742 = vpack.c.b16 %v1654, %v1650
        %v1743 = vpack.c.b16 %v1659, %v1655
        %v1744 = vpack.c.b16 %v1660, %v1656
        %v1745 = vpack.c.b16 %v1661, %v1657
        %v1746 = vpack.c.b16 %v1662, %v1658
        %v1747 = vpack.c.b16 %v1667, %v1663
        %v1748 = vpack.c.b16 %v1668, %v1664
        %v1749 = vpack.c.b16 %v1669, %v1665
        %v1750 = vpack.c.b16 %v1670, %v1666
        %v1751 = vpack.c.b16 %v1675, %v1671
        %v1752 = vpack.c.b16 %v1676, %v1672
        %v1753 = vpack.c.b16 %v1677, %v1673
        %v1754 = vpack.c.b16 %v1678, %v1674
        %v1755 = vpack.c.b16 %v1683, %v1679
        %v1756 = vpack.c.b16 %v1684, %v1680
        %v1757 = vpack.c.b16 %v1685, %v1681
        %v1758 = vpack.c.b16 %v1686, %v1682
        %v1759 = vpack.c.b16 %v1691, %v1687
        %v1760 = vpack.c.b16 %v1692, %v1688
        %v1761 = vpack.c.b16 %v1693, %v1689
        %v1762 = vpack.c.b16 %v1694, %v1690
        %v1763 = vpack.c.b16 %v1699, %v1695
        %v1764 = vpack.c.b16 %v1700, %v1696
        %v1765 = vpack.c.b16 %v1701, %v1697
        %v1766 = vpack.c.b16 %v1702, %v1698
        %1831 = vmatprep.subr.bf16.mxu0 %v1704
        %1832 = vmatpush1.bf16.msra.mxu0 %v1703
        %1833 = vmatprep.subr.bf16.mxu0 %v1708
        %1834 = vmatpush1.bf16.msra.mxu0 %v1707
        %1835 = vmatprep.subr.bf16.mxu0 %v1712
        %1836 = vmatpush1.bf16.msra.mxu0 %v1711
        %1837 = vmatprep.subr.bf16.mxu0 %v1716
        %1838 = vmatpush1.bf16.msra.mxu0 %v1715
        %1839 = vmatprep.subr.bf16.mxu0 %v1720
        %1840 = vmatpush1.bf16.msra.mxu0 %v1719
        %1841 = vmatprep.subr.bf16.mxu0 %v1724
        %1842 = vmatpush1.bf16.msra.mxu0 %v1723
        %1843 = vmatprep.subr.bf16.mxu0 %v1728
        %1844 = vmatpush1.bf16.msra.mxu0 %v1727
        %1845 = vmatprep.subr.bf16.mxu0 %v1732
        %1846 = vmatpush1.bf16.msra.mxu0 %v1731
        %1847 = vmatprep.subr.bf16.mxu0 %v1736
        %1848 = vmatpush1.bf16.msra.mxu0 %v1735
        %1849 = vmatprep.subr.bf16.mxu0 %v1740
        %1850 = vmatpush1.bf16.msra.mxu0 %v1739
        %1851 = vmatprep.subr.bf16.mxu0 %v1744
        %1852 = vmatpush1.bf16.msra.mxu0 %v1743
        %1853 = vmatprep.subr.bf16.mxu0 %v1748
        %1854 = vmatpush1.bf16.msra.mxu0 %v1747
        %1855 = vmatprep.subr.bf16.mxu0 %v1752
        %1856 = vmatpush1.bf16.msra.mxu0 %v1751
        %1857 = vmatprep.subr.bf16.mxu0 %v1756
        %1858 = vmatpush1.bf16.msra.mxu0 %v1755
        %1859 = vmatprep.subr.bf16.mxu0 %v1760
        %1860 = vmatpush1.bf16.msra.mxu0 %v1759
        %1861 = vmatprep.subr.bf16.mxu0 %v1764
        %1862 = vmatpush1.bf16.msra.mxu0 %v1763
        %1863 = vmatprep.mubr.bf16.mxu0 %v1418
        %1864 = vmatmul.mubr.bf16.gmra.mrb[0].mxu0 %v1417
        %v1865 = vpop.f32.mrb[0].mxu0
        %v1866 = vadd.f32 %v1494, %v1865
        %v1867 = vpop.f32.mrb[0].mxu0
        %v1868 = vadd.f32 %v1498, %v1867
        %v1869 = vpop.f32.mrb[0].mxu0
        %v1870 = vadd.f32 %v1494, %v1869
        %v1871 = vpop.f32.mrb[0].mxu0
        %v1872 = vadd.f32 %v1498, %v1871
        %1873 = vmatprep.mubr.bf16.mxu0 %v1420
        %1874 = vmatmul.mubr.bf16.gmra.mrb[0].mxu0 %v1419
        %v1875 = vpop.f32.mrb[0].mxu0
        %v1876 = vadd.f32 %v1494, %v1875
        %v1877 = vpop.f32.mrb[0].mxu0
        %v1878 = vadd.f32 %v1498, %v1877
        %v1879 = vpop.f32.mrb[0].mxu0
        %v1880 = vadd.f32 %v1494, %v1879
        %v1881 = vpop.f32.mrb[0].mxu0
        %v1882 = vadd.f32 %v1498, %v1881
        %1883 = vmatprep.mubr.bf16.mxu0 %v1422
        %1884 = vmatmul.mubr.bf16.gmra.mrb[0].mxu0 %v1421
        %v1885 = vpop.f32.mrb[0].mxu0
        %v1886 = vadd.f32 %v1494, %v1885
        %v1887 = vpop.f32.mrb[0].mxu0
        %v1888 = vadd.f32 %v1498, %v1887
        %v1889 = vpop.f32.mrb[0].mxu0
        %v1890 = vadd.f32 %v1494, %v1889
        %v1891 = vpop.f32.mrb[0].mxu0
        %v1892 = vadd.f32 %v1498, %v1891
        %1893 = vmatprep.mubr.bf16.mxu0 %v1424
        %1894 = vmatmul.mubr.bf16.gmra.mrb[0].mxu0 %v1423
        %v1895 = vpop.f32.mrb[0].mxu0
        %v1896 = vadd.f32 %v1494, %v1895
        %v1897 = vpop.f32.mrb[0].mxu0
        %v1898 = vadd.f32 %v1498, %v1897
        %v1899 = vpop.f32.mrb[0].mxu0
        %v1900 = vpop.f32.mrb[0].mxu0
        %1901 = vdwg.mxu0
        %1902 = vmatprep.subr.bf16.mxu0 %v1706
        %1903 = vmatpush1.bf16.msra.mxu0 %v1705
        %1904 = vmatprep.subr.bf16.mxu0 %v1710
        %1905 = vmatpush1.bf16.msra.mxu0 %v1709
        %1906 = vmatprep.subr.bf16.mxu0 %v1714
        %1907 = vmatpush1.bf16.msra.mxu0 %v1713
        %1908 = vmatprep.subr.bf16.mxu0 %v1718
        %1909 = vmatpush1.bf16.msra.mxu0 %v1717
        %1910 = vmatprep.subr.bf16.mxu0 %v1722
        %1911 = vmatpush1.bf16.msra.mxu0 %v1721
        %1912 = vmatprep.subr.bf16.mxu0 %v1726
        %1913 = vmatpush1.bf16.msra.mxu0 %v1725
        %1914 = vmatprep.subr.bf16.mxu0 %v1730
        %1915 = vmatpush1.bf16.msra.mxu0 %v1729
        %1916 = vmatprep.subr.bf16.mxu0 %v1734
        %1917 = vmatpush1.bf16.msra.mxu0 %v1733
        %1918 = vmatprep.subr.bf16.mxu0 %v1738
        %1919 = vmatpush1.bf16.msra.mxu0 %v1737
        %1920 = vmatprep.subr.bf16.mxu0 %v1742
        %1921 = vmatpush1.bf16.msra.mxu0 %v1741
        %1922 = vmatprep.subr.bf16.mxu0 %v1746
        %1923 = vmatpush1.bf16.msra.mxu0 %v1745
        %1924 = vmatprep.subr.bf16.mxu0 %v1750
        %1925 = vmatpush1.bf16.msra.mxu0 %v1749
        %1926 = vmatprep.subr.bf16.mxu0 %v1754
        %1927 = vmatpush1.bf16.msra.mxu0 %v1753
        %1928 = vmatprep.subr.bf16.mxu0 %v1758
        %1929 = vmatpush1.bf16.msra.mxu0 %v1757
        %1930 = vmatprep.subr.bf16.mxu0 %v1762
        %1931 = vmatpush1.bf16.msra.mxu0 %v1761
        %1932 = vmatprep.subr.bf16.mxu0 %v1766
        %1933 = vmatpush1.bf16.msra.mxu0 %v1765
        %1934 = vmatprep.mubr.bf16.mxu0 %v1418
        %1935 = vmatmul.mubr.bf16.gmra.mrb[0].mxu0 %v1417
        %v1936 = vpop.f32.mrb[0].mxu0
        %v1937 = vadd.f32 %v1502, %v1936
        %v1938 = vpop.f32.mrb[0].mxu0
        %v1939 = vadd.f32 %v1506, %v1938
        %v1940 = vpop.f32.mrb[0].mxu0
        %v1941 = vadd.f32 %v1502, %v1940
        %v1942 = vpop.f32.mrb[0].mxu0
        %v1943 = vadd.f32 %v1506, %v1942
        %1944 = vmatprep.mubr.bf16.mxu0 %v1420
        %1945 = vmatmul.mubr.bf16.gmra.mrb[0].mxu0 %v1419
        %v1946 = vpop.f32.mrb[0].mxu0
        %v1947 = vadd.f32 %v1502, %v1946
        %v1948 = vpop.f32.mrb[0].mxu0
        %v1949 = vadd.f32 %v1506, %v1948
        %v1950 = vpop.f32.mrb[0].mxu0
        %v1951 = vadd.f32 %v1502, %v1950
        %v1952 = vpop.f32.mrb[0].mxu0
        %v1953 = vadd.f32 %v1506, %v1952
        %1954 = vmatprep.mubr.bf16.mxu0 %v1422
        %1955 = vmatmul.mubr.bf16.gmra.mrb[0].mxu0 %v1421
        %v1956 = vpop.f32.mrb[0].mxu0
        %v1957 = vadd.f32 %v1502, %v1956
        %v1958 = vpop.f32.mrb[0].mxu0
        %v1959 = vadd.f32 %v1506, %v1958
        %v1960 = vpop.f32.mrb[0].mxu0
        %v1961 = vadd.f32 %v1502, %v1960
        %v1962 = vpop.f32.mrb[0].mxu0
        %v1963 = vadd.f32 %v1506, %v1962
        %1964 = vmatprep.mubr.bf16.mxu0 %v1424
        %1965 = vmatmul.mubr.bf16.gmra.mrb[0].mxu0 %v1423
        %v1966 = vpop.f32.mrb[0].mxu0
        %v1967 = vadd.f32 %v1502, %v1966
        %v1968 = vpop.f32.mrb[0].mxu0
        %v1969 = vadd.f32 %v1506, %v1968
        %v1970 = vpop.f32.mrb[0].mxu0
        %v1971 = vpop.f32.mrb[0].mxu0
        %1972 = vdwg.mxu0
        %v1973 = vmax.f32 %v1866, 0.0
        %v1974 = vmax.f32 %v1868, 0.0
        %v1975 = vmax.f32 %v1937, 0.0
        %v1976 = vmax.f32 %v1939, 0.0
        %v1977 = vmax.f32 %v1870, 0.0
        %v1978 = vmax.f32 %v1872, 0.0
        %v1979 = vmax.f32 %v1941, 0.0
        %v1980 = vmax.f32 %v1943, 0.0
        %v1981 = vmax.f32 %v1876, 0.0
        %v1982 = vmax.f32 %v1878, 0.0
        %v1983 = vmax.f32 %v1947, 0.0
        %v1984 = vmax.f32 %v1949, 0.0
        %v1985 = vmax.f32 %v1880, 0.0
        %v1986 = vmax.f32 %v1882, 0.0
        %v1987 = vmax.f32 %v1951, 0.0
        %v1988 = vmax.f32 %v1953, 0.0
        %v1989 = vmax.f32 %v1886, 0.0
        %v1990 = vmax.f32 %v1888, 0.0
        %v1991 = vmax.f32 %v1957, 0.0
        %v1992 = vmax.f32 %v1959, 0.0
        %v1993 = vmax.f32 %v1890, 0.0
        %v1994 = vmax.f32 %v1892, 0.0
        %v1995 = vmax.f32 %v1961, 0.0
        %v1996 = vmax.f32 %v1963, 0.0
        %v1997 = vmax.f32 %v1896, 0.0
        %v1998 = vmax.f32 %v1898, 0.0
        %v1999 = vmax.f32 %v1967, 0.0
        %v2000 = vmax.f32 %v1969, 0.0
        %v2001 = vmax.f32 %v1973, %v1975
        %v2002 = vmax.f32 %v1974, %v1976
        %v2003 = vmax.f32 %v1977, %v1979
        %v2004 = vmax.f32 %v1978, %v1980
        %v2005 = vmax.f32 %v1981, %v1983
        %v2006 = vmax.f32 %v1982, %v1984
        %v2007 = vmax.f32 %v1985, %v1987
        %v2008 = vmax.f32 %v1986, %v1988
        %v2009 = vmax.f32 %v1989, %v1991
        %v2010 = vmax.f32 %v1990, %v1992
        %v2011 = vmax.f32 %v1993, %v1995
        %v2012 = vmax.f32 %v1994, %v1996
        %v2013 = vmax.f32 %v1997, %v1999
        %v2014 = vmax.f32 %v1998, %v2000
        %v2015 = vpack.c.bf16 %v2003, %v2001
        %v2016 = vpack.c.bf16 %v2004, %v2002
        %v2017 = vpack.c.bf16 %v2007, %v2005
        %v2018 = vpack.c.bf16 %v2008, %v2006
        %v2019 = vpack.c.bf16 %v2011, %v2009
        %v2020 = vpack.c.bf16 %v2012, %v2010
        %v2021 = vpack.c.bf16 %v2013, %v2013
        %v2022 = vpack.c.bf16 %v2014, %v2014
        %v2023 = vld [vmem:[#allocation8] sm:$0xff]
        %v2024 = vld [vmem:[#allocation8 + $0x8] sm:$0xff]
        %v2025 = vld [vmem:[#allocation8 + $0x10] sm:$0xff]
        %v2026 = vld [vmem:[#allocation8 + $0x18] sm:$0xff]
        %v2027 = vld [vmem:[#allocation8 + $0x20] sm:$0xff]
        %v2028 = vld [vmem:[#allocation8 + $0x28] sm:$0xff]
        %v2029 = vld [vmem:[#allocation8 + $0x30] sm:$0xff]
        %v2030 = vld [vmem:[#allocation8 + $0x38] sm:$0xff]
        %v2031 = vld [vmem:[#allocation8 + $0x40] sm:$0xff]
        %v2032 = vld [vmem:[#allocation8 + $0x48] sm:$0xff]
        %v2033 = vld [vmem:[#allocation8 + $0x50] sm:$0xff]
        %v2034 = vld [vmem:[#allocation8 + $0x58] sm:$0xff]
        %v2035 = vld [vmem:[#allocation8 + $0x60] sm:$0xff]
        %v2036 = vld [vmem:[#allocation8 + $0x68] sm:$0xff]
        %v2037 = vld [vmem:[#allocation8 + $0x70] sm:$0xff]
        %v2038 = vld [vmem:[#allocation8 + $0x78] sm:$0xff]
        %v2039 = vld [vmem:[#allocation8 + $0x80] sm:$0xff]
        %v2040 = vld [vmem:[#allocation8 + $0x88] sm:$0xff]
        %v2041 = vld [vmem:[#allocation8 + $0x90] sm:$0xff]
        %v2042 = vld [vmem:[#allocation8 + $0x98] sm:$0xff]
        %v2043 = vld [vmem:[#allocation8 + $0xa0] sm:$0xff]
        %v2044 = vld [vmem:[#allocation8 + $0xa8] sm:$0xff]
        %v2045 = vld [vmem:[#allocation8 + $0xb0] sm:$0xff]
        %v2046 = vld [vmem:[#allocation8 + $0xb8] sm:$0xff]
        %v2047 = vld [vmem:[#allocation8 + $0xc0] sm:$0xff]
        %v2048 = vld [vmem:[#allocation8 + $0xc8] sm:$0xff]
        %v2049 = vld [vmem:[#allocation8 + $0xd0] sm:$0xff]
        %v2050 = vld [vmem:[#allocation8 + $0xd8] sm:$0xff]
        %v2051 = vld [vmem:[#allocation8 + $0xe0] sm:$0xff]
        %v2052 = vld [vmem:[#allocation8 + $0xe8] sm:$0xff]
        %v2053 = vld [vmem:[#allocation8 + $0xf0] sm:$0xff]
        %v2054 = vld [vmem:[#allocation8 + $0xf8] sm:$0xff]
        %v2055 = vld [vmem:[%s8] sm:$0x3]
        %v2057 = vlaneseq
        %v2058 = vshrl.u32 %v2057, 7
        %v2059 = vsub.s32 0, %v2058
        %v2060 = vrot.slane %v2055, %v2059
        %v2061 = vlaneseq
        %v2062 = vshrl.u32 %v2061, 7
        %v2063 = vsub.s32 1, %v2062
        %v2064 = vrot.slane %v2055, %v2063
        %v2099 = vunpack.c.l.b16 %v2023
        %v2100 = vunpack.c.h.b16 %v2023
        %v2101 = vunpack.c.l.b16 %v2024
        %v2102 = vunpack.c.h.b16 %v2024
        %v2103 = vunpack.c.l.b16 %v2025
        %v2104 = vunpack.c.h.b16 %v2025
        %v2105 = vunpack.c.l.b16 %v2026
        %v2106 = vunpack.c.h.b16 %v2026
        %v2107 = vunpack.c.l.b16 %v2027
        %v2108 = vunpack.c.h.b16 %v2027
        %v2109 = vunpack.c.l.b16 %v2028
        %v2110 = vunpack.c.h.b16 %v2028
        %v2111 = vunpack.c.l.b16 %v2029
        %v2112 = vunpack.c.h.b16 %v2029
        %v2113 = vunpack.c.l.b16 %v2030
        %v2114 = vunpack.c.h.b16 %v2030
        %v2115 = vunpack.c.l.b16 %v2031
        %v2116 = vunpack.c.h.b16 %v2031
        %v2117 = vunpack.c.l.b16 %v2032
        %v2118 = vunpack.c.h.b16 %v2032
        %v2119 = vunpack.c.l.b16 %v2033
        %v2120 = vunpack.c.h.b16 %v2033
        %v2121 = vunpack.c.l.b16 %v2034
        %v2122 = vunpack.c.h.b16 %v2034
        %v2123 = vunpack.c.l.b16 %v2035
        %v2124 = vunpack.c.h.b16 %v2035
        %v2125 = vunpack.c.l.b16 %v2036
        %v2126 = vunpack.c.h.b16 %v2036
        %v2127 = vunpack.c.l.b16 %v2037
        %v2128 = vunpack.c.h.b16 %v2037
        %v2129 = vunpack.c.l.b16 %v2038
        %v2130 = vunpack.c.h.b16 %v2038
        %v2131 = vunpack.c.l.b16 %v2039
        %v2132 = vunpack.c.h.b16 %v2039
        %v2133 = vunpack.c.l.b16 %v2040
        %v2134 = vunpack.c.h.b16 %v2040
        %v2135 = vunpack.c.l.b16 %v2041
        %v2136 = vunpack.c.h.b16 %v2041
        %v2137 = vunpack.c.l.b16 %v2042
        %v2138 = vunpack.c.h.b16 %v2042
        %v2139 = vunpack.c.l.b16 %v2043
        %v2140 = vunpack.c.h.b16 %v2043
        %v2141 = vunpack.c.l.b16 %v2044
        %v2142 = vunpack.c.h.b16 %v2044
        %v2143 = vunpack.c.l.b16 %v2045
        %v2144 = vunpack.c.h.b16 %v2045
        %v2145 = vunpack.c.l.b16 %v2046
        %v2146 = vunpack.c.h.b16 %v2046
        %v2147 = vunpack.c.l.b16 %v2047
        %v2148 = vunpack.c.h.b16 %v2047
        %v2149 = vunpack.c.l.b16 %v2048
        %v2150 = vunpack.c.h.b16 %v2048
        %v2151 = vunpack.c.l.b16 %v2049
        %v2152 = vunpack.c.h.b16 %v2049
        %v2153 = vunpack.c.l.b16 %v2050
        %v2154 = vunpack.c.h.b16 %v2050
        %v2155 = vunpack.c.l.b16 %v2051
        %v2156 = vunpack.c.h.b16 %v2051
        %v2157 = vunpack.c.l.b16 %v2052
        %v2158 = vunpack.c.h.b16 %v2052
        %v2159 = vunpack.c.l.b16 %v2053
        %v2160 = vunpack.c.h.b16 %v2053
        %v2161 = vunpack.c.l.b16 %v2054
        %v2162 = vunpack.c.h.b16 %v2054
        %v2163 = vpack.c.b16 %v2101, %v2099
        %v2164 = vpack.c.b16 %v2102, %v2100
        %v2165 = vpack.c.b16 %v2105, %v2103
        %v2166 = vpack.c.b16 %v2106, %v2104
        %v2167 = vpack.c.b16 %v2109, %v2107
        %v2168 = vpack.c.b16 %v2110, %v2108
        %v2169 = vpack.c.b16 %v2113, %v2111
        %v2170 = vpack.c.b16 %v2114, %v2112
        %v2171 = vpack.c.b16 %v2117, %v2115
        %v2172 = vpack.c.b16 %v2118, %v2116
        %v2173 = vpack.c.b16 %v2121, %v2119
        %v2174 = vpack.c.b16 %v2122, %v2120
        %v2175 = vpack.c.b16 %v2125, %v2123
        %v2176 = vpack.c.b16 %v2126, %v2124
        %v2177 = vpack.c.b16 %v2129, %v2127
        %v2178 = vpack.c.b16 %v2130, %v2128
        %v2179 = vpack.c.b16 %v2133, %v2131
        %v2180 = vpack.c.b16 %v2134, %v2132
        %v2181 = vpack.c.b16 %v2137, %v2135
        %v2182 = vpack.c.b16 %v2138, %v2136
        %v2183 = vpack.c.b16 %v2141, %v2139
        %v2184 = vpack.c.b16 %v2142, %v2140
        %v2185 = vpack.c.b16 %v2145, %v2143
        %v2186 = vpack.c.b16 %v2146, %v2144
        %v2187 = vpack.c.b16 %v2149, %v2147
        %v2188 = vpack.c.b16 %v2150, %v2148
        %v2189 = vpack.c.b16 %v2153, %v2151
        %v2190 = vpack.c.b16 %v2154, %v2152
        %v2191 = vpack.c.b16 %v2157, %v2155
        %v2192 = vpack.c.b16 %v2158, %v2156
        %v2193 = vpack.c.b16 %v2161, %v2159
        %v2194 = vpack.c.b16 %v2162, %v2160
        %2227 = vmatprep.subr.bf16.mxu0 %v2164
        %2228 = vmatpush1.bf16.msra.mxu0 %v2163
        %2229 = vmatprep.subr.bf16.mxu0 %v2166
        %2230 = vmatpush1.bf16.msra.mxu0 %v2165
        %2231 = vmatprep.subr.bf16.mxu0 %v2168
        %2232 = vmatpush1.bf16.msra.mxu0 %v2167
        %2233 = vmatprep.subr.bf16.mxu0 %v2170
        %2234 = vmatpush1.bf16.msra.mxu0 %v2169
        %2235 = vmatprep.subr.bf16.mxu0 %v2172
        %2236 = vmatpush1.bf16.msra.mxu0 %v2171
        %2237 = vmatprep.subr.bf16.mxu0 %v2174
        %2238 = vmatpush1.bf16.msra.mxu0 %v2173
        %2239 = vmatprep.subr.bf16.mxu0 %v2176
        %2240 = vmatpush1.bf16.msra.mxu0 %v2175
        %2241 = vmatprep.subr.bf16.mxu0 %v2178
        %2242 = vmatpush1.bf16.msra.mxu0 %v2177
        %2243 = vmatprep.subr.bf16.mxu0 %v2180
        %2244 = vmatpush1.bf16.msra.mxu0 %v2179
        %2245 = vmatprep.subr.bf16.mxu0 %v2182
        %2246 = vmatpush1.bf16.msra.mxu0 %v2181
        %2247 = vmatprep.subr.bf16.mxu0 %v2184
        %2248 = vmatpush1.bf16.msra.mxu0 %v2183
        %2249 = vmatprep.subr.bf16.mxu0 %v2186
        %2250 = vmatpush1.bf16.msra.mxu0 %v2185
        %2251 = vmatprep.subr.bf16.mxu0 %v2188
        %2252 = vmatpush1.bf16.msra.mxu0 %v2187
        %2253 = vmatprep.subr.bf16.mxu0 %v2190
        %2254 = vmatpush1.bf16.msra.mxu0 %v2189
        %2255 = vmatprep.subr.bf16.mxu0 %v2192
        %2256 = vmatpush1.bf16.msra.mxu0 %v2191
        %2257 = vmatprep.subr.bf16.mxu0 %v2194
        %2258 = vmatpush1.bf16.msra.mxu0 %v2193
        %2259 = vmatprep.mubr.bf16.mxu0 %v2016
        %2260 = vmatmul.mubr.bf16.gmra.mrb[0].mxu0 %v2015
        %v2261 = vpop.f32.mrb[0].mxu0
        %v2262 = vadd.f32 %v2060, %v2261
        %v2263 = vpop.f32.mrb[0].mxu0
        %v2264 = vadd.f32 %v2064, %v2263
        %v2265 = vpop.f32.mrb[0].mxu0
        %v2266 = vadd.f32 %v2060, %v2265
        %v2267 = vpop.f32.mrb[0].mxu0
        %v2268 = vadd.f32 %v2064, %v2267
        %2269 = vmatprep.mubr.bf16.mxu0 %v2018
        %2270 = vmatmul.mubr.bf16.gmra.mrb[0].mxu0 %v2017
        %v2271 = vpop.f32.mrb[0].mxu0
        %v2272 = vadd.f32 %v2060, %v2271
        %v2273 = vpop.f32.mrb[0].mxu0
        %v2274 = vadd.f32 %v2064, %v2273
        %v2275 = vpop.f32.mrb[0].mxu0
        %v2276 = vadd.f32 %v2060, %v2275
        %v2277 = vpop.f32.mrb[0].mxu0
        %v2278 = vadd.f32 %v2064, %v2277
        %2279 = vmatprep.mubr.bf16.mxu0 %v2020
        %2280 = vmatmul.mubr.bf16.gmra.mrb[0].mxu0 %v2019
        %v2281 = vpop.f32.mrb[0].mxu0
        %v2282 = vadd.f32 %v2060, %v2281
        %v2283 = vpop.f32.mrb[0].mxu0
        %v2284 = vadd.f32 %v2064, %v2283
        %v2285 = vpop.f32.mrb[0].mxu0
        %v2286 = vadd.f32 %v2060, %v2285
        %v2287 = vpop.f32.mrb[0].mxu0
        %v2288 = vadd.f32 %v2064, %v2287
        %2289 = vmatprep.mubr.bf16.mxu0 %v2022
        %2290 = vmatmul.mubr.bf16.gmra.mrb[0].mxu0 %v2021
        %v2291 = vpop.f32.mrb[0].mxu0
        %v2292 = vadd.f32 %v2060, %v2291
        %v2293 = vpop.f32.mrb[0].mxu0
        %v2294 = vadd.f32 %v2064, %v2293
        %v2295 = vpop.f32.mrb[0].mxu0
        %v2296 = vpop.f32.mrb[0].mxu0
        %2297 = vdwg.mxu0
        %v2298 = vmax.f32 %v2262, 0.0
        %v2299 = vmax.f32 %v2264, 0.0
        %v2300 = vmax.f32 %v2266, 0.0
        %v2301 = vmax.f32 %v2268, 0.0
        %v2302 = vmax.f32 %v2272, 0.0
        %v2303 = vmax.f32 %v2274, 0.0
        %v2304 = vmax.f32 %v2276, 0.0
        %v2305 = vmax.f32 %v2278, 0.0
        %v2306 = vmax.f32 %v2282, 0.0
        %v2307 = vmax.f32 %v2284, 0.0
        %v2308 = vmax.f32 %v2286, 0.0
        %v2309 = vmax.f32 %v2288, 0.0
        %v2310 = vmax.f32 %v2292, 0.0
        %v2311 = vmax.f32 %v2294, 0.0
        %v2312 = vpack.c.bf16 %v2300, %v2298
        %v2313 = vpack.c.bf16 %v2301, %v2299
        %v2314 = vpack.c.bf16 %v2304, %v2302
        %v2315 = vpack.c.bf16 %v2305, %v2303
        %v2316 = vpack.c.bf16 %v2308, %v2306
        %v2317 = vpack.c.bf16 %v2309, %v2307
        %v2318 = vpack.c.bf16 %v2310, %v2310
        %v2319 = vpack.c.bf16 %v2311, %v2311
        %v2320 = vld [vmem:[%s9] sm:$0xf]
        %v2321 = vld [vmem:[%s9 + $0x4] sm:$0xf]
        %v2322 = vld [vmem:[%s9 + $0x8] sm:$0xf]
        %v2323 = vld [vmem:[%s9 + $0xc] sm:$0xf]
        %v2324 = vld [vmem:[%s9 + $0x10] sm:$0xf]
        %v2325 = vld [vmem:[%s9 + $0x14] sm:$0xf]
        %v2326 = vld [vmem:[%s9 + $0x18] sm:$0xf]
        %v2327 = vld [vmem:[%s9 + $0x1c] sm:$0xf]
        %v2328 = vld [vmem:[%s9 + $0x20] sm:$0xf]
        %v2329 = vld [vmem:[%s9 + $0x24] sm:$0xf]
        %v2330 = vld [vmem:[%s9 + $0x28] sm:$0xf]
        %v2331 = vld [vmem:[%s9 + $0x2c] sm:$0xf]
        %v2332 = vld [vmem:[%s9 + $0x30] sm:$0xf]
        %v2333 = vld [vmem:[%s9 + $0x34] sm:$0xf]
        %v2334 = vld [vmem:[%s9 + $0x38] sm:$0xf]
        %v2335 = vld [vmem:[%s9 + $0x3c] sm:$0xf]
        %v2336 = vld [vmem:[%s9 + $0x40] sm:$0xf]
        %v2337 = vld [vmem:[%s9 + $0x44] sm:$0xf]
        %v2338 = vld [vmem:[%s9 + $0x48] sm:$0xf]
        %v2339 = vld [vmem:[%s9 + $0x4c] sm:$0xf]
        %v2340 = vld [vmem:[%s9 + $0x50] sm:$0xf]
        %v2341 = vld [vmem:[%s9 + $0x54] sm:$0xf]
        %v2342 = vld [vmem:[%s9 + $0x58] sm:$0xf]
        %v2343 = vld [vmem:[%s9 + $0x5c] sm:$0xf]
        %v2344 = vld [vmem:[%s9 + $0x60] sm:$0xf]
        %v2345 = vld [vmem:[%s9 + $0x64] sm:$0xf]
        %v2346 = vld [vmem:[%s9 + $0x68] sm:$0xf]
        %v2347 = vld [vmem:[%s9 + $0x6c] sm:$0xf]
        %v2348 = vld [vmem:[%s9 + $0x70] sm:$0xf]
        %v2349 = vld [vmem:[%s9 + $0x74] sm:$0xf]
        %v2350 = vld [vmem:[%s9 + $0x78] sm:$0xf]
        %v2351 = vld [vmem:[%s9 + $0x7c] sm:$0xf]
        %v2352 = vld [vmem:[%s10] sm:$0x1]
        %v2354 = vlaneseq
        %v2355 = vshrl.u32 %v2354, 7
        %v2356 = vsub.s32 0, %v2355
        %v2357 = vrot.slane %v2352, %v2356
        %v2391 = vunpack.c.l.b16 %v2320
        %v2392 = vunpack.c.l.b16 %v2321
        %v2393 = vunpack.c.l.b16 %v2322
        %v2394 = vunpack.c.l.b16 %v2323
        %v2395 = vunpack.c.l.b16 %v2324
        %v2396 = vunpack.c.l.b16 %v2325
        %v2397 = vunpack.c.l.b16 %v2326
        %v2398 = vunpack.c.l.b16 %v2327
        %v2399 = vunpack.c.l.b16 %v2328
        %v2400 = vunpack.c.l.b16 %v2329
        %v2401 = vunpack.c.l.b16 %v2330
        %v2402 = vunpack.c.l.b16 %v2331
        %v2403 = vunpack.c.l.b16 %v2332
        %v2404 = vunpack.c.l.b16 %v2333
        %v2405 = vunpack.c.l.b16 %v2334
        %v2406 = vunpack.c.l.b16 %v2335
        %v2407 = vunpack.c.l.b16 %v2336
        %v2408 = vunpack.c.l.b16 %v2337
        %v2409 = vunpack.c.l.b16 %v2338
        %v2410 = vunpack.c.l.b16 %v2339
        %v2411 = vunpack.c.l.b16 %v2340
        %v2412 = vunpack.c.l.b16 %v2341
        %v2413 = vunpack.c.l.b16 %v2342
        %v2414 = vunpack.c.l.b16 %v2343
        %v2415 = vunpack.c.l.b16 %v2344
        %v2416 = vunpack.c.l.b16 %v2345
        %v2417 = vunpack.c.l.b16 %v2346
        %v2418 = vunpack.c.l.b16 %v2347
        %v2419 = vunpack.c.l.b16 %v2348
        %v2420 = vunpack.c.l.b16 %v2349
        %v2421 = vunpack.c.l.b16 %v2350
        %v2422 = vunpack.c.l.b16 %v2351
        %v2423 = vpack.c.b16 %v2392, %v2391
        %v2424 = vpack.c.b16 %v2394, %v2393
        %v2425 = vpack.c.b16 %v2396, %v2395
        %v2426 = vpack.c.b16 %v2398, %v2397
        %v2427 = vpack.c.b16 %v2400, %v2399
        %v2428 = vpack.c.b16 %v2402, %v2401
        %v2429 = vpack.c.b16 %v2404, %v2403
        %v2430 = vpack.c.b16 %v2406, %v2405
        %v2431 = vpack.c.b16 %v2408, %v2407
        %v2432 = vpack.c.b16 %v2410, %v2409
        %v2433 = vpack.c.b16 %v2412, %v2411
        %v2434 = vpack.c.b16 %v2414, %v2413
        %v2435 = vpack.c.b16 %v2416, %v2415
        %v2436 = vpack.c.b16 %v2418, %v2417
        %v2437 = vpack.c.b16 %v2420, %v2419
        %v2438 = vpack.c.b16 %v2422, %v2421
        %2455 = vmatprep.subr.bf16.mxu0 0
        %2456 = vmatpush1.bf16.msra.mxu0 %v2423
        %2457 = vmatprep.subr.bf16.mxu0 0
        %2458 = vmatpush1.bf16.msra.mxu0 %v2424
        %2459 = vmatprep.subr.bf16.mxu0 0
        %2460 = vmatpush1.bf16.msra.mxu0 %v2425
        %2461 = vmatprep.subr.bf16.mxu0 0
        %2462 = vmatpush1.bf16.msra.mxu0 %v2426
        %2463 = vmatprep.subr.bf16.mxu0 0
        %2464 = vmatpush1.bf16.msra.mxu0 %v2427
        %2465 = vmatprep.subr.bf16.mxu0 0
        %2466 = vmatpush1.bf16.msra.mxu0 %v2428
        %2467 = vmatprep.subr.bf16.mxu0 0
        %2468 = vmatpush1.bf16.msra.mxu0 %v2429
        %2469 = vmatprep.subr.bf16.mxu0 0
        %2470 = vmatpush1.bf16.msra.mxu0 %v2430
        %2471 = vmatprep.subr.bf16.mxu0 0
        %2472 = vmatpush1.bf16.msra.mxu0 %v2431
        %2473 = vmatprep.subr.bf16.mxu0 0
        %2474 = vmatpush1.bf16.msra.mxu0 %v2432
        %2475 = vmatprep.subr.bf16.mxu0 0
        %2476 = vmatpush1.bf16.msra.mxu0 %v2433
        %2477 = vmatprep.subr.bf16.mxu0 0
        %2478 = vmatpush1.bf16.msra.mxu0 %v2434
        %2479 = vmatprep.subr.bf16.mxu0 0
        %2480 = vmatpush1.bf16.msra.mxu0 %v2435
        %2481 = vmatprep.subr.bf16.mxu0 0
        %2482 = vmatpush1.bf16.msra.mxu0 %v2436
        %2483 = vmatprep.subr.bf16.mxu0 0
        %2484 = vmatpush1.bf16.msra.mxu0 %v2437
        %2485 = vmatprep.subr.bf16.mxu0 0
        %2486 = vmatpush1.bf16.msra.mxu0 %v2438
        %2487 = vmatprep.mubr.bf16.mxu0 %v2313
        %2488 = vmatmul.mubr.bf16.gmra.mrb[0].mxu0 %v2312
        %v2489 = vpop.f32.mrb[0].mxu0
        %v2490 = vadd.f32 %v2357, %v2489
        %v2491 = vpop.f32.mrb[0].mxu0
        %v2492 = vpop.f32.mrb[0].mxu0
        %v2493 = vadd.f32 %v2357, %v2492
        %v2494 = vpop.f32.mrb[0].mxu0
        %2495 = vmatprep.mubr.bf16.mxu0 %v2315
        %2496 = vmatmul.mubr.bf16.gmra.mrb[0].mxu0 %v2314
        %v2497 = vpop.f32.mrb[0].mxu0
        %v2498 = vadd.f32 %v2357, %v2497
        %v2499 = vpop.f32.mrb[0].mxu0
        %v2500 = vpop.f32.mrb[0].mxu0
        %v2501 = vadd.f32 %v2357, %v2500
        %v2502 = vpop.f32.mrb[0].mxu0
        %2503 = vmatprep.mubr.bf16.mxu0 %v2317
        %2504 = vmatmul.mubr.bf16.gmra.mrb[0].mxu0 %v2316
        %v2505 = vpop.f32.mrb[0].mxu0
        %v2506 = vadd.f32 %v2357, %v2505
        %v2507 = vpop.f32.mrb[0].mxu0
        %v2508 = vpop.f32.mrb[0].mxu0
        %v2509 = vadd.f32 %v2357, %v2508
        %v2510 = vpop.f32.mrb[0].mxu0
        %2511 = vmatprep.mubr.bf16.mxu0 %v2319
        %2512 = vmatmul.mubr.bf16.gmra.mrb[0].mxu0 %v2318
        %v2513 = vpop.f32.mrb[0].mxu0
        %v2514 = vadd.f32 %v2357, %v2513
        %v2515 = vpop.f32.mrb[0].mxu0
        %v2516 = vpop.f32.mrb[0].mxu0
        %v2517 = vpop.f32.mrb[0].mxu0
        %2518 = vdwg.mxu0
        %v2519 = vmax.f32 %v2490, 0.0
        %v2520 = vmax.f32 %v2493, 0.0
        %v2521 = vmax.f32 %v2498, 0.0
        %v2522 = vmax.f32 %v2501, 0.0
        %v2523 = vmax.f32 %v2506, 0.0
        %v2524 = vmax.f32 %v2509, 0.0
        %v2525 = vmax.f32 %v2514, 0.0
        %v2526 = vld [vmem:[#allocation10] sm:$0xff]
        %v2527 = vld [vmem:[#allocation10 + $0x8] sm:$0xff]
        %v2528 = vld [vmem:[#allocation10 + $0x10] sm:$0xff]
        %v2529 = vld [vmem:[#allocation10 + $0x18] sm:$0xff]
        %v2530 = vld [vmem:[#allocation10 + $0x20] sm:$0xff]
        %v2531 = vld [vmem:[#allocation10 + $0x28] sm:$0xff]
        %v2532 = vld [vmem:[#allocation10 + $0x30] sm:$0xff]
        %v2533 = vld [vmem:[#allocation10 + $0x38] sm:$0xff]
        %v2534 = vld [vmem:[#allocation10 + $0x40] sm:$0xff]
        %v2535 = vld [vmem:[#allocation10 + $0x48] sm:$0xff]
        %v2536 = vld [vmem:[#allocation10 + $0x50] sm:$0xff]
        %v2537 = vld [vmem:[#allocation10 + $0x58] sm:$0xff]
        %v2538 = vld [vmem:[#allocation10 + $0x60] sm:$0xff]
        %v2539 = vld [vmem:[#allocation10 + $0x68] sm:$0xff]
        %v2540 = vld [vmem:[#allocation10 + $0x70] sm:$0xff]
        %v2541 = vld [vmem:[#allocation10 + $0x78] sm:$0xff]
        %v2542 = vld [vmem:[%s12] sm:$0x1]
        %v2544 = vlaneseq
        %v2545 = vshrl.u32 %v2544, 7
        %v2546 = vsub.s32 0, %v2545
        %v2547 = vrot.slane %v2542, %v2546
        %2549 = vmatprep.subr.mxu0 0.0
        %2550 = vmatpush1.msra.mxu0 %v2526
        %2551 = vmatprep.subr.mxu0 0.0
        %2552 = vmatpush1.msra.mxu0 %v2527
        %2553 = vmatprep.subr.mxu0 0.0
        %2554 = vmatpush1.msra.mxu0 %v2528
        %2555 = vmatprep.subr.mxu0 0.0
        %2556 = vmatpush1.msra.mxu0 %v2529
        %2557 = vmatprep.subr.mxu0 0.0
        %2558 = vmatpush1.msra.mxu0 %v2530
        %2559 = vmatprep.subr.mxu0 0.0
        %2560 = vmatpush1.msra.mxu0 %v2531
        %2561 = vmatprep.subr.mxu0 0.0
        %2562 = vmatpush1.msra.mxu0 %v2532
        %2563 = vmatprep.subr.mxu0 0.0
        %2564 = vmatpush1.msra.mxu0 %v2533
        %2565 = vmatprep.subr.mxu0 0.0
        %2566 = vmatpush1.msra.mxu0 %v2534
        %2567 = vmatprep.subr.mxu0 0.0
        %2568 = vmatpush1.msra.mxu0 %v2535
        %2569 = vmatprep.subr.mxu0 0.0
        %2570 = vmatpush1.msra.mxu0 %v2536
        %2571 = vmatprep.subr.mxu0 0.0
        %2572 = vmatpush1.msra.mxu0 %v2537
        %2573 = vmatprep.subr.mxu0 0.0
        %2574 = vmatpush1.msra.mxu0 %v2538
        %2575 = vmatprep.subr.mxu0 0.0
        %2576 = vmatpush1.msra.mxu0 %v2539
        %2577 = vmatprep.subr.mxu0 0.0
        %2578 = vmatpush1.msra.mxu0 %v2540
        %2579 = vmatprep.subr.mxu0 0.0
        %2580 = vmatpush1.msra.mxu0 %v2541
        %2581 = vmatprep.subr.mxu0 0.0
        %2582 = vmatpush1.msra.mxu0 0.0
        %2583 = vmatprep.subr.mxu0 0.0
        %2584 = vmatpush1.msra.mxu0 0.0
        %2585 = vmatprep.subr.mxu0 0.0
        %2586 = vmatpush1.msra.mxu0 0.0
        %2587 = vmatprep.subr.mxu0 0.0
        %2588 = vmatpush1.msra.mxu0 0.0
        %2589 = vmatprep.subr.mxu0 0.0
        %2590 = vmatpush1.msra.mxu0 0.0
        %2591 = vmatprep.subr.mxu0 0.0
        %2592 = vmatpush1.msra.mxu0 0.0
        %2593 = vmatprep.subr.mxu0 0.0
        %2594 = vmatpush1.msra.mxu0 0.0
        %2595 = vmatprep.subr.mxu0 0.0
        %2596 = vmatpush1.msra.mxu0 0.0
        %2597 = vmatprep.subr.mxu0 0.0
        %2598 = vmatpush1.msra.mxu0 0.0
        %2599 = vmatprep.subr.mxu0 0.0
        %2600 = vmatpush1.msra.mxu0 0.0
        %2601 = vmatprep.subr.mxu0 0.0
        %2602 = vmatpush1.msra.mxu0 0.0
        %2603 = vmatprep.subr.mxu0 0.0
        %2604 = vmatpush1.msra.mxu0 0.0
        %2605 = vmatprep.subr.mxu0 0.0
        %2606 = vmatpush1.msra.mxu0 0.0
        %2607 = vmatprep.subr.mxu0 0.0
        %2608 = vmatpush1.msra.mxu0 0.0
        %2609 = vmatprep.subr.mxu0 0.0
        %2610 = vmatpush1.msra.mxu0 0.0
        %2611 = vmatprep.subr.mxu0 0.0
        %2612 = vmatpush1.msra.mxu0 0.0
        %2613 = vmatprep.mubr.f32.mxu0 0.0
        %2614 = vmatmul.mubr.f32.gmra.mrb[0].mxu0 %v2519
        %v2615 = vpop.f32.mrb[0].mxu0
        %v2616 = vadd.f32 %v2547, %v2615
        %v2617 = vpop.f32.mrb[0].mxu0
        %2618 = vmatprep.mubr.f32.mxu0 0.0
        %2619 = vmatmul.mubr.f32.gmra.mrb[0].mxu0 %v2520
        %v2620 = vpop.f32.mrb[0].mxu0
        %v2621 = vadd.f32 %v2547, %v2620
        %v2622 = vpop.f32.mrb[0].mxu0
        %2623 = vmatprep.mubr.f32.mxu0 0.0
        %2624 = vmatmul.mubr.f32.gmra.mrb[0].mxu0 %v2521
        %v2625 = vpop.f32.mrb[0].mxu0
        %v2626 = vadd.f32 %v2547, %v2625
        %v2627 = vpop.f32.mrb[0].mxu0
        %2628 = vmatprep.mubr.f32.mxu0 0.0
        %2629 = vmatmul.mubr.f32.gmra.mrb[0].mxu0 %v2522
        %v2630 = vpop.f32.mrb[0].mxu0
        %v2631 = vadd.f32 %v2547, %v2630
        %v2632 = vpop.f32.mrb[0].mxu0
        %2633 = vmatprep.mubr.f32.mxu0 0.0
        %2634 = vmatmul.mubr.f32.gmra.mrb[0].mxu0 %v2523
        %v2635 = vpop.f32.mrb[0].mxu0
        %v2636 = vadd.f32 %v2547, %v2635
        %v2637 = vpop.f32.mrb[0].mxu0
        %2638 = vmatprep.mubr.f32.mxu0 0.0
        %2639 = vmatmul.mubr.f32.gmra.mrb[0].mxu0 %v2524
        %v2640 = vpop.f32.mrb[0].mxu0
        %v2641 = vadd.f32 %v2547, %v2640
        %v2642 = vpop.f32.mrb[0].mxu0
        %2643 = vmatprep.mubr.f32.mxu0 0.0
        %2644 = vmatmul.mubr.f32.gmra.mrb[0].mxu0 %v2525
        %v2645 = vpop.f32.mrb[0].mxu0
        %v2646 = vadd.f32 %v2547, %v2645
        %v2647 = vpop.f32.mrb[0].mxu0
        %2648 = vdwg.mxu0
        %v2649 = vsub.f32 0.0, %v2616
        %v2650 = vsub.f32 0.0, %v2621
        %v2651 = vsub.f32 0.0, %v2626
        %v2652 = vsub.f32 0.0, %v2631
        %v2653 = vsub.f32 0.0, %v2636
        %v2654 = vsub.f32 0.0, %v2641
        %v2655 = vsub.f32 0.0, %v2646
        %v2656 = vmul.f32 %v2649, 1.442695
        %v2657 = vpow.pop %v2656
        %v2658 = vmul.f32 %v2650, 1.442695
        %v2659 = vpow.pop %v2658
        %v2660 = vmul.f32 %v2651, 1.442695
        %v2661 = vpow.pop %v2660
        %v2662 = vmul.f32 %v2652, 1.442695
        %v2663 = vpow.pop %v2662
        %v2664 = vmul.f32 %v2653, 1.442695
        %v2665 = vpow.pop %v2664
        %v2666 = vmul.f32 %v2654, 1.442695
        %v2667 = vpow.pop %v2666
        %v2668 = vmul.f32 %v2655, 1.442695
        %v2669 = vpow.pop %v2668
        %v2670 = vadd.f32 %v2657, 1.0
        %v2671 = vadd.f32 %v2659, 1.0
        %v2672 = vadd.f32 %v2661, 1.0
        %v2673 = vadd.f32 %v2663, 1.0
        %v2674 = vadd.f32 %v2665, 1.0
        %v2675 = vadd.f32 %v2667, 1.0
        %v2676 = vadd.f32 %v2669, 1.0
        %v2677 = vrcp.pop %v2670
        %v2678 = vrcp.pop %v2671
        %v2679 = vrcp.pop %v2672
        %v2680 = vrcp.pop %v2673
        %v2681 = vrcp.pop %v2674
        %v2682 = vrcp.pop %v2675
        %v2683 = vrcp.pop %v2676
        %2684 = vst [vmem:[%s507] sm:$0xff] %v2677
        %2685 = vst [vmem:[%s507 + $0x8] sm:$0xff] %v2678
        %2686 = vst [vmem:[%s507 + $0x10] sm:$0xff] %v2679
        %2687 = vst [vmem:[%s507 + $0x18] sm:$0xff] %v2680
        %2688 = vst [vmem:[%s507 + $0x20] sm:$0xff] %v2681
        %2689 = vst [vmem:[%s507 + $0x28] sm:$0xff] %v2682
        %2690 = vst [vmem:[%s507 + $0x30] sm:$0xff] %v2683
        %s2691 = sand.u32 %s316, 1
        %s2692 = scalar_lea.sflag [#allocation4], %s2691
        %s2693 = sand.u32 %s316, 1
        %s2694 = smul.addr %s2693, 56
        %s2695 = scalar_lea.vmem [#allocation11], %s2694
        // Predicated region
        $region93: #{tpu_custom_call.1} parent=71 // pred_check
          %p2696 = pneg %p326
        $region94: #{tpu_custom_call.1} parent=71 // pred_check_branch
          %2698 = sbr.rel (%p2696) target = $region96
        $region95: #{tpu_custom_call.1} parent=71 // pred_region
          %s2699 = smul.u32 7, %s30
          %s2701 = ssub.s32 896, 896
          %2702 = vsyncadd %s2692, %s2701
          %s2703 = smul.addr %s2699, 128
          %s2704 = scalar_lea.hbm %s13, %s2703
          %s2705 = sshll.u32 %s2695, 4
          %s2706 = int_to_ptr.vmem [resolvable:$true] %s2705
          %2711 = dma.vmem_to_hbm [thread:$0]  %s2706, 896, %s2704, %s2692, 128, 128, 8
        $region96: #{tpu_custom_call.1} parent=71 // pred_fallthru
          _
      $region72: #{tpu_custom_call.1} parent=5 // pred_fallthru
        _
      %p2712 = scmp.le.s32.totalorder 2, %s25
      // Predicated region
      $region97: #{tpu_custom_call.1} parent=5 // pred_check
        %p2713 = pneg %p2712
      $region98: #{tpu_custom_call.1} parent=5 // pred_check_branch
        %2715 = sbr.rel (%p2713) target = $region100
      $region99: #{tpu_custom_call.1} parent=5 // pred_region
        %s2716 = ssub.s32 %s25, 2
        // Predicated region
        $region101: #{tpu_custom_call.1} parent=99 // pred_check
          %p2717 = pneg %p332
        $region102: #{tpu_custom_call.1} parent=99 // pred_check_branch
          %2719 = sbr.rel (%p2717) target = $region104
        $region103: #{tpu_custom_call.1} parent=99 // pred_region
          %s2720 = sand.u32 %s317, 1
          %s2721 = scalar_lea.sflag [#allocation4], %s2720
          %s2722 = sand.u32 %s317, 1
          %s2723 = smul.addr %s2722, 56
          %s2724 = scalar_lea.vmem [#allocation11], %s2723
          %2725 = dma.done %s2721, 896
        $region104: #{tpu_custom_call.1} parent=99 // pred_fallthru
          _
      $region100: #{tpu_custom_call.1} parent=5 // pred_fallthru
        _
    $region6: #{tpu_custom_call.1} parent=1 // loop_footer
      %s29 = sadd.s32 1, %s25
    $region7: #{tpu_custom_call.1} parent=1 // loop_footer_branch
      %24 = sbr.rel target = $region3
    $region8: #{tpu_custom_call.1} parent=1 // loop_exit
      _
    %2726 = vsyncpa [#allocation3], 1
    %s2727 = scalar_lea.sflag [#allocation3], 1
    %2728 = vsyncpa %s2727, 1
    %2729 = vsyncpa [#allocation6], 1
    %2730 = vsyncpa [#allocation9], 1
    %2731 = vsyncpa [#allocation4], 1
    %s2732 = scalar_lea.sflag [#allocation4], 1
    %2733 = vsyncpa %s2732, 1

</llo_original>
